<compile_context>
chip_gen: v7x
topology: tpu7x:2x2x1
jax: 0.10.0
libtpu: 0.0.40
codegen_flags: <defaults>
</compile_context>

<pallas_src>
import functools  # noqa: F401  (kept for easy re-introduction of static params)

import jax
import jax.numpy as jnp
from jax.experimental import pallas as pl
from jax.experimental.pallas import tpu as pltpu


def _attention_kernel(vi_ref, vq_ref, wi_ref, wq_ref, b_ref, wa_ref, mask_ref,
                      out_ref):
    tb, Rp, d = vi_ref.shape
    k = wi_ref.shape[1]
    f32 = jnp.float32

    vi = vi_ref[...]                                    # (TB, Rp, d), stream dtype
    vq = vq_ref[...]                                    # (TB, d), f32

    # fc_images(vi) on the MXU as one 2-D matmul; Rp is a multiple of the
    # sublane-packing factor so the leading-dim merge is a metadata-only reshape.
    img = jnp.dot(vi.reshape(tb * Rp, d), wi_ref[...],
                  preferred_element_type=f32).reshape(tb, Rp, k)

    # fc_questions(vq); bi+bq are pre-folded into the small (TB, k) tensor.
    qf = jnp.dot(vq.astype(wq_ref.dtype), wq_ref[...],
                 preferred_element_type=f32)
    qf = qf + b_ref[...]                                # (TB, k)

    # NOTE(v5e): this tanh over TB*Rp*k elements is the EUP-bound piece at
    # small d; everything around it runs in f32 on the VPU.
    ha = jnp.tanh(qf[:, None, :] + img)                 # (TB, Rp, k), f32

    # attention_layer(ha): output width 1 -> VPU multiply + XLU lane-reduce over
    # k instead of an MXU matmul with N=1. (attention bias ba is a softmax
    # shift, i.e. a no-op, so it is not computed at all.)
    scores = jnp.sum(ha * wa_ref[...], axis=-1, keepdims=True)   # (TB, Rp, 1)
    scores = scores + mask_ref[...]                     # -1e30 on padded rows

    # Softmax over regions (axis=1); R stays in the sublane position so `attn`
    # broadcasts against vi with no lane<->sublane transpose. (Lane-dense
    # softmax only becomes worthwhile for much larger R.)
    m = jnp.max(scores, axis=1, keepdims=True)
    e = jnp.exp(scores - m)
    denom = jnp.sum(e, axis=1, keepdims=True)
    attn = e * pl.reciprocal(denom)                     # (TB, Rp, 1), f32

    # Weighted sum + residual, all in f32 (padded rows are zero and have
    # exactly-zero attention weight).
    filtered = jnp.sum(attn * vi.astype(f32), axis=1)   # (TB, d)
    out_ref[...] = (filtered + vq).astype(out_ref.dtype)


def _vmem_limit_bytes():
    """Generation-aware VMEM budget: ~48 MiB on v7x (64 MiB/TC), 96 MiB on
    v5e/v6e (128 MiB). Falls back to the conservative v7x number off-device."""
    cap = 64 * 1024 * 1024
    try:
        cap = int(getattr(pltpu.get_tpu_info(), "vmem_capacity_bytes", cap))
    except Exception:
        pass
    return min(cap * 3 // 4, 100 * 1024 * 1024)


def _pick_block_b(B, Rp, d, k, stream_itemsize, *,
                  target_block_bytes=2 << 20, min_steps=4,
                  vmem_budget_bytes=None):
    """Pick the batch block from a VMEM-byte target (not an MXU-row minimum),
    while keeping enough grid steps for DMA/compute overlap (>= min_steps when
    the batch allows it; v7x shards the grid across 2 TensorCores)."""
    if vmem_budget_bytes is None:
        vmem_budget_bytes = _vmem_limit_bytes()
    cands = sorted(tb for tb in range(1, B + 1)
                   if B % tb == 0 and (tb % 8 == 0 or tb == B))

    def footprint(tb):
        vi_blk = tb * Rp * d * stream_itemsize
        io_blk = 2 * (vi_blk + 2 * tb * d * 4)          # double-buffered vi/vq/out
        f32_tmp = 2 * tb * Rp * k * 4                   # img + ha live values
        return io_blk + f32_tmp + vi_blk                # + slack for vi upcast

    fits = [tb for tb in cands
            if tb * Rp * d * stream_itemsize <= target_block_bytes
            and footprint(tb) <= int(vmem_budget_bytes * 0.6)]
    if not fits:
        fits = [cands[0]]
    pipelined = [tb for tb in fits if B // tb >= min_steps]
    return max(pipelined) if pipelined else min(fits)


def san_attention(vi, vq, wi, bi, wq, bq, wa, ba=None, *, block_b=None,
                  mxu_dtype=jnp.bfloat16, single_buffer_weights=True):
    """Forward pass of the SAN Attention module.

    vi: (B,R,d), vq: (B,d). wi/wq pre-transposed (d,k); wa is (1,k).
    ba is accepted for interface parity but unused (softmax shift-invariance).
    mxu_dtype is the streaming / MXU-operand dtype (bf16 by default);
    accumulation and all non-matmul math stay in f32.
    """
    del ba  # shift-invariant under softmax -> no effect on the output
    B, R, d = vi.shape
    k = wi.shape[1]
    f32 = jnp.float32
    mxu_dtype = jnp.dtype(mxu_dtype)

    # Pad R so the (tb,Rp,d)<->(tb*Rp,d) reshape stays tile-aligned even for
    # production R=36/49 (sublane packing: 8 rows for f32, 16 for bf16).
    sublane = 8 * (4 // mxu_dtype.itemsize)
    Rp = -(-R // sublane) * sublane

    vi_s = vi.astype(mxu_dtype)
    if Rp != R:
        vi_s = jnp.pad(vi_s, ((0, 0), (0, Rp - R), (0, 0)))
    vq_s = vq.astype(f32)                               # small; keep residual f32
    wi_s = wi.astype(mxu_dtype)
    wq_s = wq.astype(mxu_dtype)
    b_comb = (bi.astype(f32) + bq.astype(f32)).reshape(1, k)
    wa_s = wa.astype(f32).reshape(1, k)
    # Additive score mask: 0 on valid rows, -1e30 on padded rows (static).
    row_mask = jnp.where(jnp.arange(Rp)[None, :, None] < R,
                         0.0, -1e30).astype(f32)

    if block_b is None:
        block_b = _pick_block_b(B, Rp, d, k, mxu_dtype.itemsize)
    assert B % block_b == 0 and (block_b % 8 == 0 or block_b == B)
    grid = (B // block_b,)
    vmem_limit = _vmem_limit_bytes()

    def _call(single_buffer):
        # Grid-invariant operands: request single buffering when supported.
        const_kw = {"pipeline_mode": pl.Buffered(1)} if single_buffer else {}
        in_specs = [
            pl.BlockSpec((block_b, Rp, d), lambda i: (i, 0, 0)),   # vi (streamed)
            pl.BlockSpec((block_b, d), lambda i: (i, 0)),          # vq
            pl.BlockSpec((d, k), lambda i: (0, 0), **const_kw),    # wi (resident)
            pl.BlockSpec((d, k), lambda i: (0, 0), **const_kw),    # wq (resident)
            pl.BlockSpec((1, k), lambda i: (0, 0), **const_kw),    # bi+bq
            pl.BlockSpec((1, k), lambda i: (0, 0), **const_kw),    # wa
            pl.BlockSpec((1, Rp, 1), lambda i: (0, 0, 0), **const_kw),  # row mask
        ]
        out_spec = pl.BlockSpec((block_b, d), lambda i: (i, 0))
        return pl.pallas_call(
            _attention_kernel,
            out_shape=jax.ShapeDtypeStruct((B, d), f32),
            grid=grid,
            in_specs=in_specs,
            out_specs=out_spec,
            compiler_params=pltpu.CompilerParams(
                dimension_semantics=("parallel",),      # megacore batch split
                vmem_limit_bytes=vmem_limit,            # generation-aware budget
            ),
        )(vi_s, vq_s, wi_s, wq_s, b_comb, wa_s, row_mask)

    if single_buffer_weights:
        try:
            return _call(True)
        except Exception:
            # pipeline_mode=pl.Buffered(1) not supported by this jax build for
            # pallas_call BlockSpecs -> fall back to default double buffering.
            pass
    return _call(False)


def san_attention_ref(vi, vq, wi, bi, wq, bq, wa, ba, *, mxu_dtype=None):
    """Pure-JAX reference. With mxu_dtype set it mirrors the kernel's precision
    policy (quantized matmul/stream operands, f32 accumulation); with None it is
    the full-f32 module semantics."""
    f32 = jnp.float32
    if mxu_dtype is not None:
        vi_mm = vi.astype(mxu_dtype)
        vi_st = vi_mm.astype(f32)
        vq_mm = vq.astype(mxu_dtype)
        wi_c, wq_c = wi.astype(mxu_dtype), wq.astype(mxu_dtype)
    else:
        vi_mm, vi_st, vq_mm, wi_c, wq_c = vi, vi, vq, wi, wq
    img = jnp.einsum('brd,dk->brk', vi_mm, wi_c,
                     preferred_element_type=f32, precision='highest')
    qf = jnp.einsum('bd,dk->bk', vq_mm, wq_c,
                    preferred_element_type=f32, precision='highest')
    ha = jnp.tanh(qf[:, None, :] + bi + bq + img)
    scores = jnp.sum(ha * wa[0].astype(f32), axis=-1) + ba[0, 0]
    attn = jax.nn.softmax(scores, axis=1)
    return jnp.sum(attn[:, :, None] * vi_st, axis=1) + vq.astype(f32)


if __name__ == "__main__":
    # Small but lane/sublane-dense shapes consistent with the module
    # (module defaults d=1024, k=512; here d=k=128).
    d, k = 128, 128
    key = jax.random.PRNGKey(0)
    ks = jax.random.split(key, 8)

    # nn.Linear weights stored transposed as (in_dim, out_dim); attention_layer
    # weight kept in its native (1, k) row layout.
    wi = jax.random.normal(ks[2], (d, k), jnp.float32) * 0.05   # fc_images
    bi = jax.random.normal(ks[3], (1, k), jnp.float32) * 0.05
    wq = jax.random.normal(ks[4], (d, k), jnp.float32) * 0.05   # fc_questions
    bq = jax.random.normal(ks[5], (1, k), jnp.float32) * 0.05
    wa = jax.random.normal(ks[6], (1, k), jnp.float32) * 0.05   # attention_layer
    ba = jax.random.normal(ks[7], (1, 1), jnp.float32) * 0.05

    cases = [
        (32, 8, jnp.bfloat16),    # bf16 MXU path (R padded 8 -> 16 for packing)
        (32, 12, jnp.bfloat16),   # production-style R not a multiple of 8
        (32, 8, jnp.float32),     # full-f32 fallback path, no padding / no mask
    ]
    for B, R, mdt in cases:
        vi = jax.random.normal(ks[0], (B, R, d), jnp.float32)
        vq = jax.random.normal(ks[1], (B, d), jnp.float32)

        out = jax.block_until_ready(
            san_attention(vi, vq, wi, bi, wq, bq, wa, ba, mxu_dtype=mdt))
        assert out.shape == (B, d) and out.dtype == jnp.float32

        mxu = None if jnp.dtype(mdt) == jnp.dtype(jnp.float32) else mdt
        ref_match = san_attention_ref(vi, vq, wi, bi, wq, bq, wa, ba,
                                      mxu_dtype=mxu)
        ref_f32 = san_attention_ref(vi, vq, wi, bi, wq, bq, wa, ba)

        # Tight check against a reference with the same precision policy ...
        assert jnp.allclose(out, ref_match, atol=2e-3, rtol=2e-3), \
            f"mismatch vs matched-precision reference (B={B}, R={R}, {mdt})"
        # ... and a sanity check against the pure-f32 module output.
        assert jnp.allclose(out, ref_f32, atol=5e-2, rtol=5e-2), \
            f"mismatch vs f32 reference (B={B}, R={R}, {mdt})"

    # TODO(synk): nn.Dropout is omitted (module constructed with dropout=0.0 -> no-op).
    print("KERNEL_OK")
</pallas_src>

<mosaic_0001>
module attributes {stable_mosaic.version = 11 : i64} {
  func.func @_attention_kernel(%arg0: i32, %arg1: memref<8x16x128xbf16, #tpu.memory_space<vmem>>, %arg2: memref<8x128xf32, #tpu.memory_space<vmem>>, %arg3: memref<128x128xbf16, #tpu.memory_space<vmem>>, %arg4: memref<128x128xbf16, #tpu.memory_space<vmem>>, %arg5: memref<1x128xf32, #tpu.memory_space<vmem>>, %arg6: memref<1x128xf32, #tpu.memory_space<vmem>>, %arg7: memref<1x16x1xf32, #tpu.memory_space<vmem>>, %arg8: memref<8x128xf32, #tpu.memory_space<vmem>>) attributes {dimension_semantics = [#tpu.dimension_semantics<parallel>], iteration_bounds = array<i64: 4>, scalar_prefetch = 0 : i64, scratch_operands = 0 : i64, tpu.core_type = #tpu.core_type<tc>, window_params = [{transform_indices = @transform_0, window_bounds = array<i64: 8, 16, 128>}, {transform_indices = @transform_1, window_bounds = array<i64: 8, 128>}, {pipeline_mode = #tpu.pipeline_mode<synchronous>, transform_indices = @transform_2, window_bounds = array<i64: 128, 128>}, {pipeline_mode = #tpu.pipeline_mode<synchronous>, transform_indices = @transform_3, window_bounds = array<i64: 128, 128>}, {pipeline_mode = #tpu.pipeline_mode<synchronous>, transform_indices = @transform_4, window_bounds = array<i64: 1, 128>}, {pipeline_mode = #tpu.pipeline_mode<synchronous>, transform_indices = @transform_5, window_bounds = array<i64: 1, 128>}, {pipeline_mode = #tpu.pipeline_mode<synchronous>, transform_indices = @transform_6, window_bounds = array<i64: 1, 16, 1>}, {transform_indices = @transform_7, window_bounds = array<i64: 8, 128>}]} {
    %c0 = arith.constant 0 : index
    %c0_0 = arith.constant 0 : index
    %c0_1 = arith.constant 0 : index
    %0 = vector.load %arg1[%c0, %c0_0, %c0_1] : memref<8x16x128xbf16, #tpu.memory_space<vmem>>, vector<8x16x128xbf16>
    %c0_2 = arith.constant 0 : index
    %c0_3 = arith.constant 0 : index
    %1 = vector.load %arg2[%c0_2, %c0_3] : memref<8x128xf32, #tpu.memory_space<vmem>>, vector<8x128xf32>
    %2 = vector.shape_cast %0 : vector<8x16x128xbf16> to vector<128x128xbf16>
    %c0_4 = arith.constant 0 : index
    %c0_5 = arith.constant 0 : index
    %3 = vector.load %arg3[%c0_4, %c0_5] : memref<128x128xbf16, #tpu.memory_space<vmem>>, vector<128x128xbf16>
    %cst = arith.constant dense<0.000000e+00> : vector<128x128xf32>
    %4 = tpu.matmul %2, %3, %cst {dimension_numbers = #tpu.dot_dimension_numbers<[1], [0], [0], [1], [0, 0, 1, 1], [], []>} : vector<128x128xbf16>, vector<128x128xbf16>, vector<128x128xf32> -> vector<128x128xf32>
    %5 = vector.shape_cast %4 : vector<128x128xf32> to vector<8x16x128xf32>
    %6 = arith.truncf %1 : vector<8x128xf32> to vector<8x128xbf16>
    %c0_6 = arith.constant 0 : index
    %c0_7 = arith.constant 0 : index
    %7 = vector.load %arg4[%c0_6, %c0_7] : memref<128x128xbf16, #tpu.memory_space<vmem>>, vector<128x128xbf16>
    %cst_8 = arith.constant dense<0.000000e+00> : vector<8x128xf32>
    %8 = tpu.matmul %6, %7, %cst_8 {dimension_numbers = #tpu.dot_dimension_numbers<[1], [0], [0], [1], [0, 0, 1, 1], [], []>} : vector<8x128xbf16>, vector<128x128xbf16>, vector<8x128xf32> -> vector<8x128xf32>
    %c0_9 = arith.constant 0 : index
    %c0_10 = arith.constant 0 : index
    %9 = vector.load %arg5[%c0_9, %c0_10] : memref<1x128xf32, #tpu.memory_space<vmem>>, vector<1x128xf32>
    %10 = vector.broadcast %9 : vector<1x128xf32> to vector<8x128xf32>
    %11 = arith.addf %8, %10 : vector<8x128xf32>
    %12 = vector.shape_cast %11 : vector<8x128xf32> to vector<8x1x128xf32>
    %13 = vector.broadcast %12 : vector<8x1x128xf32> to vector<8x16x128xf32>
    %14 = arith.addf %13, %5 : vector<8x16x128xf32>
    %15 = math.tanh %14 : vector<8x16x128xf32>
    %c0_11 = arith.constant 0 : index
    %c0_12 = arith.constant 0 : index
    %16 = vector.load %arg6[%c0_11, %c0_12] : memref<1x128xf32, #tpu.memory_space<vmem>>, vector<1x128xf32>
    %17 = vector.shape_cast %16 : vector<1x128xf32> to vector<1x1x128xf32>
    %18 = vector.broadcast %17 : vector<1x1x128xf32> to vector<8x16x128xf32>
    %19 = arith.mulf %15, %18 : vector<8x16x128xf32>
    %cst_13 = arith.constant dense<0.000000e+00> : vector<8x16xf32>
    %20 = vector.multi_reduction <add>, %19, %cst_13 [2] : vector<8x16x128xf32> to vector<8x16xf32>
    %21 = vector.shape_cast %20 : vector<8x16xf32> to vector<8x16x1xf32>
    %c0_14 = arith.constant 0 : index
    %c0_15 = arith.constant 0 : index
    %c0_16 = arith.constant 0 : index
    %22 = vector.load %arg7[%c0_14, %c0_15, %c0_16] : memref<1x16x1xf32, #tpu.memory_space<vmem>>, vector<1x16x1xf32>
    %23 = vector.broadcast %22 : vector<1x16x1xf32> to vector<8x16x1xf32>
    %24 = arith.addf %21, %23 : vector<8x16x1xf32>
    %cst_17 = arith.constant dense<0xFF800000> : vector<8x1xf32>
    %25 = vector.multi_reduction <maximumf>, %24, %cst_17 [1] : vector<8x16x1xf32> to vector<8x1xf32>
    %26 = vector.shape_cast %25 : vector<8x1xf32> to vector<8x1x1xf32>
    %27 = vector.broadcast %26 : vector<8x1x1xf32> to vector<8x16x1xf32>
    %28 = arith.subf %24, %27 : vector<8x16x1xf32>
    %29 = math.exp %28 : vector<8x16x1xf32>
    %cst_18 = arith.constant dense<0.000000e+00> : vector<8x1xf32>
    %30 = vector.multi_reduction <add>, %29, %cst_18 [1] : vector<8x16x1xf32> to vector<8x1xf32>
    %31 = vector.shape_cast %30 : vector<8x1xf32> to vector<8x1x1xf32>
    %32 = tpu.reciprocal %31 : vector<8x1x1xf32> -> vector<8x1x1xf32>
    %33 = vector.broadcast %32 : vector<8x1x1xf32> to vector<8x16x1xf32>
    %34 = arith.mulf %29, %33 : vector<8x16x1xf32>
    %35 = arith.extf %0 : vector<8x16x128xbf16> to vector<8x16x128xf32>
    %36 = vector.broadcast %34 : vector<8x16x1xf32> to vector<8x16x128xf32>
    %37 = arith.mulf %36, %35 : vector<8x16x128xf32>
    %cst_19 = arith.constant dense<0.000000e+00> : vector<8x128xf32>
    %38 = vector.multi_reduction <add>, %37, %cst_19 [1] : vector<8x16x128xf32> to vector<8x128xf32>
    %39 = arith.addf %38, %1 : vector<8x128xf32>
    %c0_20 = arith.constant 0 : index
    %c0_21 = arith.constant 0 : index
    %40 = vector.load %arg8[%c0_20, %c0_21] : memref<8x128xf32, #tpu.memory_space<vmem>>, vector<8x128xf32>
    tpu.vector_store %arg8[%c0_20, %c0_21], %39 {strides = array<i32>} : memref<8x128xf32, #tpu.memory_space<vmem>>, vector<8x128xf32>,
    return
  }
  func.func @transform_0(%arg0: i32) -> (i32, i32, i32) {
    %c0_i32 = arith.constant 0 : i32
    %c0_i32_0 = arith.constant 0 : i32
    %c0_i32_1 = arith.constant 0 : i32
    return %arg0, %c0_i32, %c0_i32_0 : i32, i32, i32
  }
  func.func @transform_1(%arg0: i32) -> (i32, i32) {
    %c0_i32 = arith.constant 0 : i32
    %c0_i32_0 = arith.constant 0 : i32
    return %arg0, %c0_i32 : i32, i32
  }
  func.func @transform_2(%arg0: i32) -> (i32, i32) {
    %c0_i32 = arith.constant 0 : i32
    %c0_i32_0 = arith.constant 0 : i32
    %c0_i32_1 = arith.constant 0 : i32
    return %c0_i32, %c0_i32_0 : i32, i32
  }
  func.func @transform_3(%arg0: i32) -> (i32, i32) {
    %c0_i32 = arith.constant 0 : i32
    %c0_i32_0 = arith.constant 0 : i32
    %c0_i32_1 = arith.constant 0 : i32
    return %c0_i32, %c0_i32_0 : i32, i32
  }
  func.func @transform_4(%arg0: i32) -> (i32, i32) {
    %c0_i32 = arith.constant 0 : i32
    %c0_i32_0 = arith.constant 0 : i32
    %c0_i32_1 = arith.constant 0 : i32
    return %c0_i32, %c0_i32_0 : i32, i32
  }
  func.func @transform_5(%arg0: i32) -> (i32, i32) {
    %c0_i32 = arith.constant 0 : i32
    %c0_i32_0 = arith.constant 0 : i32
    %c0_i32_1 = arith.constant 0 : i32
    return %c0_i32, %c0_i32_0 : i32, i32
  }
  func.func @transform_6(%arg0: i32) -> (i32, i32, i32) {
    %c0_i32 = arith.constant 0 : i32
    %c0_i32_0 = arith.constant 0 : i32
    %c0_i32_1 = arith.constant 0 : i32
    %c0_i32_2 = arith.constant 0 : i32
    return %c0_i32, %c0_i32_0, %c0_i32_1 : i32, i32, i32
  }
  func.func @transform_7(%arg0: i32) -> (i32, i32) {
    %c0_i32 = arith.constant 0 : i32
    %c0_i32_0 = arith.constant 0 : i32
    return %arg0, %c0_i32 : i32, i32
  }
}

module attributes {stable_mosaic.version = 11 : i64} {
  func.func @_attention_kernel(%arg0: i32, %arg1: memref<8x16x128xbf16, #tpu.memory_space<vmem>>, %arg2: memref<8x128xf32, #tpu.memory_space<vmem>>, %arg3: memref<128x128xbf16, #tpu.memory_space<vmem>>, %arg4: memref<128x128xbf16, #tpu.memory_space<vmem>>, %arg5: memref<1x128xf32, #tpu.memory_space<vmem>>, %arg6: memref<1x128xf32, #tpu.memory_space<vmem>>, %arg7: memref<1x16x1xf32, #tpu.memory_space<vmem>>, %arg8: memref<8x128xf32, #tpu.memory_space<vmem>>) attributes {dimension_semantics = [#tpu.dimension_semantics<parallel>], iteration_bounds = array<i64: 4>, scalar_prefetch = 0 : i64, scratch_operands = 0 : i64, tpu.core_type = #tpu.core_type<tc>, window_params = [{transform_indices = @transform_0, window_bounds = array<i64: 8, 16, 128>}, {transform_indices = @transform_1, window_bounds = array<i64: 8, 128>}, {pipeline_mode = #tpu.pipeline_mode<synchronous>, transform_indices = @transform_2, window_bounds = array<i64: 128, 128>}, {pipeline_mode = #tpu.pipeline_mode<synchronous>, transform_indices = @transform_3, window_bounds = array<i64: 128, 128>}, {pipeline_mode = #tpu.pipeline_mode<synchronous>, transform_indices = @transform_4, window_bounds = array<i64: 1, 128>}, {pipeline_mode = #tpu.pipeline_mode<synchronous>, transform_indices = @transform_5, window_bounds = array<i64: 1, 128>}, {pipeline_mode = #tpu.pipeline_mode<synchronous>, transform_indices = @transform_6, window_bounds = array<i64: 1, 16, 1>}, {transform_indices = @transform_7, window_bounds = array<i64: 8, 128>}]} {
    %c0 = arith.constant 0 : index
    %c0_0 = arith.constant 0 : index
    %c0_1 = arith.constant 0 : index
    %0 = vector.load %arg1[%c0, %c0_0, %c0_1] : memref<8x16x128xbf16, #tpu.memory_space<vmem>>, vector<8x16x128xbf16>
    %c0_2 = arith.constant 0 : index
    %c0_3 = arith.constant 0 : index
    %1 = vector.load %arg2[%c0_2, %c0_3] : memref<8x128xf32, #tpu.memory_space<vmem>>, vector<8x128xf32>
    %2 = vector.shape_cast %0 : vector<8x16x128xbf16> to vector<128x128xbf16>
    %c0_4 = arith.constant 0 : index
    %c0_5 = arith.constant 0 : index
    %3 = vector.load %arg3[%c0_4, %c0_5] : memref<128x128xbf16, #tpu.memory_space<vmem>>, vector<128x128xbf16>
    %cst = arith.constant dense<0.000000e+00> : vector<128x128xf32>
    %4 = tpu.matmul %2, %3, %cst {dimension_numbers = #tpu.dot_dimension_numbers<[1], [0], [0], [1], [0, 0, 1, 1], [], []>} : vector<128x128xbf16>, vector<128x128xbf16>, vector<128x128xf32> -> vector<128x128xf32>
    %5 = vector.shape_cast %4 : vector<128x128xf32> to vector<8x16x128xf32>
    %6 = arith.truncf %1 : vector<8x128xf32> to vector<8x128xbf16>
    %c0_6 = arith.constant 0 : index
    %c0_7 = arith.constant 0 : index
    %7 = vector.load %arg4[%c0_6, %c0_7] : memref<128x128xbf16, #tpu.memory_space<vmem>>, vector<128x128xbf16>
    %cst_8 = arith.constant dense<0.000000e+00> : vector<8x128xf32>
    %8 = tpu.matmul %6, %7, %cst_8 {dimension_numbers = #tpu.dot_dimension_numbers<[1], [0], [0], [1], [0, 0, 1, 1], [], []>} : vector<8x128xbf16>, vector<128x128xbf16>, vector<8x128xf32> -> vector<8x128xf32>
    %c0_9 = arith.constant 0 : index
    %c0_10 = arith.constant 0 : index
    %9 = vector.load %arg5[%c0_9, %c0_10] : memref<1x128xf32, #tpu.memory_space<vmem>>, vector<1x128xf32>
    %10 = vector.broadcast %9 : vector<1x128xf32> to vector<8x128xf32>
    %11 = arith.addf %8, %10 : vector<8x128xf32>
    %12 = vector.shape_cast %11 : vector<8x128xf32> to vector<8x1x128xf32>
    %13 = vector.broadcast %12 : vector<8x1x128xf32> to vector<8x16x128xf32>
    %14 = arith.addf %13, %5 : vector<8x16x128xf32>
    %15 = math.tanh %14 : vector<8x16x128xf32>
    %c0_11 = arith.constant 0 : index
    %c0_12 = arith.constant 0 : index
    %16 = vector.load %arg6[%c0_11, %c0_12] : memref<1x128xf32, #tpu.memory_space<vmem>>, vector<1x128xf32>
    %17 = vector.shape_cast %16 : vector<1x128xf32> to vector<1x1x128xf32>
    %18 = vector.broadcast %17 : vector<1x1x128xf32> to vector<8x16x128xf32>
    %19 = arith.mulf %15, %18 : vector<8x16x128xf32>
    %cst_13 = arith.constant dense<0.000000e+00> : vector<8x16xf32>
    %20 = vector.multi_reduction <add>, %19, %cst_13 [2] : vector<8x16x128xf32> to vector<8x16xf32>
    %21 = vector.shape_cast %20 : vector<8x16xf32> to vector<8x16x1xf32>
    %c0_14 = arith.constant 0 : index
    %c0_15 = arith.constant 0 : index
    %c0_16 = arith.constant 0 : index
    %22 = vector.load %arg7[%c0_14, %c0_15, %c0_16] : memref<1x16x1xf32, #tpu.memory_space<vmem>>, vector<1x16x1xf32>
    %23 = vector.broadcast %22 : vector<1x16x1xf32> to vector<8x16x1xf32>
    %24 = arith.addf %21, %23 : vector<8x16x1xf32>
    %cst_17 = arith.constant dense<0xFF800000> : vector<8x1xf32>
    %25 = vector.multi_reduction <maximumf>, %24, %cst_17 [1] : vector<8x16x1xf32> to vector<8x1xf32>
    %26 = vector.shape_cast %25 : vector<8x1xf32> to vector<8x1x1xf32>
    %27 = vector.broadcast %26 : vector<8x1x1xf32> to vector<8x16x1xf32>
    %28 = arith.subf %24, %27 : vector<8x16x1xf32>
    %29 = math.exp %28 : vector<8x16x1xf32>
    %cst_18 = arith.constant dense<0.000000e+00> : vector<8x1xf32>
    %30 = vector.multi_reduction <add>, %29, %cst_18 [1] : vector<8x16x1xf32> to vector<8x1xf32>
    %31 = vector.shape_cast %30 : vector<8x1xf32> to vector<8x1x1xf32>
    %32 = tpu.reciprocal %31 : vector<8x1x1xf32> -> vector<8x1x1xf32>
    %33 = vector.broadcast %32 : vector<8x1x1xf32> to vector<8x16x1xf32>
    %34 = arith.mulf %29, %33 : vector<8x16x1xf32>
    %35 = arith.extf %0 : vector<8x16x128xbf16> to vector<8x16x128xf32>
    %36 = vector.broadcast %34 : vector<8x16x1xf32> to vector<8x16x128xf32>
    %37 = arith.mulf %36, %35 : vector<8x16x128xf32>
    %cst_19 = arith.constant dense<0.000000e+00> : vector<8x128xf32>
    %38 = vector.multi_reduction <add>, %37, %cst_19 [1] : vector<8x16x128xf32> to vector<8x128xf32>
    %39 = arith.addf %38, %1 : vector<8x128xf32>
    %c0_20 = arith.constant 0 : index
    %c0_21 = arith.constant 0 : index
    %40 = vector.load %arg8[%c0_20, %c0_21] : memref<8x128xf32, #tpu.memory_space<vmem>>, vector<8x128xf32>
    tpu.vector_store %arg8[%c0_20, %c0_21], %39 {strides = array<i32>} : memref<8x128xf32, #tpu.memory_space<vmem>>, vector<8x128xf32>,
    return
  }
  func.func @transform_0(%arg0: i32) -> (i32, i32, i32) {
    %c0_i32 = arith.constant 0 : i32
    %c0_i32_0 = arith.constant 0 : i32
    %c0_i32_1 = arith.constant 0 : i32
    return %arg0, %c0_i32, %c0_i32_0 : i32, i32, i32
  }
  func.func @transform_1(%arg0: i32) -> (i32, i32) {
    %c0_i32 = arith.constant 0 : i32
    %c0_i32_0 = arith.constant 0 : i32
    return %arg0, %c0_i32 : i32, i32
  }
  func.func @transform_2(%arg0: i32) -> (i32, i32) {
    %c0_i32 = arith.constant 0 : i32
    %c0_i32_0 = arith.constant 0 : i32
    %c0_i32_1 = arith.constant 0 : i32
    return %c0_i32, %c0_i32_0 : i32, i32
  }
  func.func @transform_3(%arg0: i32) -> (i32, i32) {
    %c0_i32 = arith.constant 0 : i32
    %c0_i32_0 = arith.constant 0 : i32
    %c0_i32_1 = arith.constant 0 : i32
    return %c0_i32, %c0_i32_0 : i32, i32
  }
  func.func @transform_4(%arg0: i32) -> (i32, i32) {
    %c0_i32 = arith.constant 0 : i32
    %c0_i32_0 = arith.constant 0 : i32
    %c0_i32_1 = arith.constant 0 : i32
    return %c0_i32, %c0_i32_0 : i32, i32
  }
  func.func @transform_5(%arg0: i32) -> (i32, i32) {
    %c0_i32 = arith.constant 0 : i32
    %c0_i32_0 = arith.constant 0 : i32
    %c0_i32_1 = arith.constant 0 : i32
    return %c0_i32, %c0_i32_0 : i32, i32
  }
  func.func @transform_6(%arg0: i32) -> (i32, i32, i32) {
    %c0_i32 = arith.constant 0 : i32
    %c0_i32_0 = arith.constant 0 : i32
    %c0_i32_1 = arith.constant 0 : i32
    %c0_i32_2 = arith.constant 0 : i32
    return %c0_i32, %c0_i32_0, %c0_i32_1 : i32, i32, i32
  }
  func.func @transform_7(%arg0: i32) -> (i32, i32) {
    %c0_i32 = arith.constant 0 : i32
    %c0_i32_0 = arith.constant 0 : i32
    return %arg0, %c0_i32 : i32, i32
  }
}

</mosaic_0001>

<llo_original>
// kernel: tpu_custom_call.1
$region0: #{tpu_custom_call.1}
  #allocation0 [shape = 'u32[]', space=smem, size = 0x4, offset = 0x4, fixed_abs, tag = 'smem constant byte address 0x4 - core index']
  #allocation1 [shape = 'u32[144,128]{1,0:T(1,128)}', space=vmem, size = 0x12000, scoped, tag = 'internal scratch']
  %s0 = inlined_call_operand.hbm [shape: bf16[32,16,128], index: 0, kind: input, shape index: {}]
  %s1 = inlined_call_operand.hbm [shape: f32[32,128], index: 1, kind: input, shape index: {}]
  %s2 = inlined_call_operand.hbm [shape: bf16[128,128], index: 2, kind: input, shape index: {}]
  %s3 = inlined_call_operand.hbm [shape: bf16[128,128], index: 3, kind: input, shape index: {}]
  %s4 = inlined_call_operand.vmem [shape: f32[1,128], index: 4, kind: input, shape index: {}]
  %s5 = inlined_call_operand.vmem [shape: f32[1,128], index: 5, kind: input, shape index: {}]
  %s6 = inlined_call_operand.vmem [shape: f32[1,16,1], index: 6, kind: input, shape index: {}]
  %s7 = inlined_call_operand.hbm [shape: f32[32,128], index: 7, kind: output, shape index: {}]
  %s8 = sld [smem:[#allocation0]]
  $region77: #{tpu_custom_call.1} parent=0
    _
  %s10 = ssub.s32 1, %s8
  %s11 = scalar_select 0, %s10, %s8
  $region1: #{tpu_custom_call.1} parent=0
    #allocation2 [shape = 'u8[65536]{0}', space=vmem, size = 0x10000, scoped, tag = 'input window, operand 0']
    #allocation3 [shape = 's32[2]{0}', space=sflag, size = 0x8, scoped, tag = 'scoped memory for tpu_custom_call.1']
    #allocation4 [shape = 's32[2]{0}', space=sflag, size = 0x8, scoped, tag = 'scoped memory for tpu_custom_call.1']
    #allocation5 [shape = 'u8[8192]{0}', space=vmem, size = 0x2000, scoped, tag = 'input window, operand 1']
    #allocation6 [shape = 's32[2]{0}', space=sflag, size = 0x8, scoped, tag = 'scoped memory for tpu_custom_call.1']
    #allocation7 [shape = 'u8[32768]{0}', space=vmem, size = 0x8000, scoped, tag = 'input window, operand 2, single buffered']
    #allocation8 [shape = 'u8[32768]{0}', space=vmem, size = 0x8000, scoped, tag = 'input window, operand 3, single buffered']
    #allocation9 [shape = 's32[1]{0}', space=sflag, size = 0x4, scoped, tag = 'scoped memory for tpu_custom_call.1']
    #allocation10 [shape = 'u8[8192]{0}', space=vmem, size = 0x2000, scoped, tag = 'output window, operand 0']
    %12 = vsyncpa [#allocation3], 0
    %s13 = scalar_lea.sflag [#allocation3], 1
    %14 = vsyncpa %s13, 0
    %15 = vsyncpa [#allocation6], 0
    %s16 = scalar_lea.sflag [#allocation6], 1
    %17 = vsyncpa %s16, 0
    %18 = vsyncpa [#allocation9], 0
    %19 = vsyncpa [#allocation4], 0
    %s20 = scalar_lea.sflag [#allocation4], 1
    %21 = vsyncpa %s20, 0
    loop: start=0, step=1, limit=6
    $region2: #{tpu_custom_call.1} parent=1 // loop_pre_header
      _
    $region3: #{tpu_custom_call.1} parent=1 // loop_header
      %s23 = sphi 0, %s27
      %p24 = scmp.ge.s32.totalorder %s23, 6
      %s33 = sphi 0, %s35
      %s36 = sphi 0, %s33
      %s37 = sphi 0, %s36
      %s53 = sphi 0, %s37
      %s59 = sphi 0, %s61
      %s62 = sphi 0, %s59
      %s63 = sphi 0, %s62
      %s79 = sphi 0, %s63
      %s83 = sphi 0, %s83
      %s85 = sphi 0, %s83
      %s86 = sphi 0, %s85
      %s100 = sphi 0, %s86
      %s104 = sphi 0, %s104
      %s106 = sphi 0, %s104
      %s107 = sphi 0, %s106
      %s121 = sphi 0, %s107
      %s125 = sphi 0, %s125
      %s127 = sphi 0, %s125
      %s128 = sphi 0, %s127
      %s142 = sphi 0, %s128
      %s146 = sphi 0, %s146
      %s148 = sphi 0, %s146
      %s149 = sphi 0, %s148
      %s163 = sphi 0, %s149
      %s167 = sphi 0, %s167
      %s169 = sphi 0, %s167
      %s170 = sphi 0, %s169
      %s184 = sphi 0, %s170
      %s190 = sphi 0, %s192
      %s193 = sphi 0, %s190
      %s194 = sphi 0, %s193
      %s210 = sphi 0, %s194
    $region4: #{tpu_custom_call.1} parent=1 // loop_header_branch
      %26 = sbr.rel (%p24) target = $region8
    $region5: #{tpu_custom_call.1} parent=1 // loop_body
      %s28 = ssub.s32 %s23, 1
      %s29 = ssub.s32 %s23, 2
      %s30 = sadd.s32 %s23, 1
      %s31 = ssub.s32 %s23, %s30
      %p32 = scmp.eq.s32.totalorder %s31, 0
      %s34 = sadd.s32 %s33, 1
      %s35 = scalar_select %p32, %s33, %s34
      %p38 = pneg %p32
      %p39 = scmp.eq.s32.totalorder %s23, 3
      %p40 = por %p38, %p39
      %p41 = scmp.ne.s32.totalorder %s33, %s36
      %p42 = scmp.eq.s32.totalorder %s23, 0
      %p43 = por %p41, %p42
      %p44 = scmp.ne.s32.totalorder %s33, %s36
      %p45 = scmp.eq.s32.totalorder %s28, 3
      %p46 = por %p44, %p45
      %p47 = scmp.ne.s32.totalorder %s36, %s37
      %p48 = scmp.eq.s32.totalorder %s28, 0
      %p49 = por %p47, %p48
      %p50 = scmp.ne.s32.totalorder %s36, %s37
      %p51 = scmp.eq.s32.totalorder %s29, 3
      %p52 = por %p50, %p51
      %p54 = scmp.ne.s32.totalorder %s37, %s53
      %p55 = scmp.eq.s32.totalorder %s29, 0
      %p56 = por %p54, %p55
      %s57 = ssub.s32 %s23, %s30
      %p58 = scmp.eq.s32.totalorder %s57, 0
      %s60 = sadd.s32 %s59, 1
      %s61 = scalar_select %p58, %s59, %s60
      %p64 = pneg %p58
      %p65 = scmp.eq.s32.totalorder %s23, 3
      %p66 = por %p64, %p65
      %p67 = scmp.ne.s32.totalorder %s59, %s62
      %p68 = scmp.eq.s32.totalorder %s23, 0
      %p69 = por %p67, %p68
      %p70 = scmp.ne.s32.totalorder %s59, %s62
      %p71 = scmp.eq.s32.totalorder %s28, 3
      %p72 = por %p70, %p71
      %p73 = scmp.ne.s32.totalorder %s62, %s63
      %p74 = scmp.eq.s32.totalorder %s28, 0
      %p75 = por %p73, %p74
      %p76 = scmp.ne.s32.totalorder %s62, %s63
      %p77 = scmp.eq.s32.totalorder %s29, 3
      %p78 = por %p76, %p77
      %p80 = scmp.ne.s32.totalorder %s63, %s79
      %p81 = scmp.eq.s32.totalorder %s29, 0
      %p82 = por %p80, %p81
      %s84 = sadd.s32 %s83, 1
      %p87 = scmp.eq.s32.totalorder %s23, 3
      %p88 = scmp.ne.s32.totalorder %s83, %s85
      %p89 = scmp.eq.s32.totalorder %s23, 0
      %p90 = por %p88, %p89
      %p91 = scmp.ne.s32.totalorder %s83, %s85
      %p92 = scmp.eq.s32.totalorder %s28, 3
      %p93 = por %p91, %p92
      %p94 = scmp.ne.s32.totalorder %s85, %s86
      %p95 = scmp.eq.s32.totalorder %s28, 0
      %p96 = por %p94, %p95
      %p97 = scmp.ne.s32.totalorder %s85, %s86
      %p98 = scmp.eq.s32.totalorder %s29, 3
      %p99 = por %p97, %p98
      %p101 = scmp.ne.s32.totalorder %s86, %s100
      %p102 = scmp.eq.s32.totalorder %s29, 0
      %p103 = por %p101, %p102
      %s105 = sadd.s32 %s104, 1
      %p108 = scmp.eq.s32.totalorder %s23, 3
      %p109 = scmp.ne.s32.totalorder %s104, %s106
      %p110 = scmp.eq.s32.totalorder %s23, 0
      %p111 = por %p109, %p110
      %p112 = scmp.ne.s32.totalorder %s104, %s106
      %p113 = scmp.eq.s32.totalorder %s28, 3
      %p114 = por %p112, %p113
      %p115 = scmp.ne.s32.totalorder %s106, %s107
      %p116 = scmp.eq.s32.totalorder %s28, 0
      %p117 = por %p115, %p116
      %p118 = scmp.ne.s32.totalorder %s106, %s107
      %p119 = scmp.eq.s32.totalorder %s29, 3
      %p120 = por %p118, %p119
      %p122 = scmp.ne.s32.totalorder %s107, %s121
      %p123 = scmp.eq.s32.totalorder %s29, 0
      %p124 = por %p122, %p123
      %s126 = sadd.s32 %s125, 1
      %p129 = scmp.eq.s32.totalorder %s23, 3
      %p130 = scmp.ne.s32.totalorder %s125, %s127
      %p131 = scmp.eq.s32.totalorder %s23, 0
      %p132 = por %p130, %p131
      %p133 = scmp.ne.s32.totalorder %s125, %s127
      %p134 = scmp.eq.s32.totalorder %s28, 3
      %p135 = por %p133, %p134
      %p136 = scmp.ne.s32.totalorder %s127, %s128
      %p137 = scmp.eq.s32.totalorder %s28, 0
      %p138 = por %p136, %p137
      %p139 = scmp.ne.s32.totalorder %s127, %s128
      %p140 = scmp.eq.s32.totalorder %s29, 3
      %p141 = por %p139, %p140
      %p143 = scmp.ne.s32.totalorder %s128, %s142
      %p144 = scmp.eq.s32.totalorder %s29, 0
      %p145 = por %p143, %p144
      %s147 = sadd.s32 %s146, 1
      %p150 = scmp.eq.s32.totalorder %s23, 3
      %p151 = scmp.ne.s32.totalorder %s146, %s148
      %p152 = scmp.eq.s32.totalorder %s23, 0
      %p153 = por %p151, %p152
      %p154 = scmp.ne.s32.totalorder %s146, %s148
      %p155 = scmp.eq.s32.totalorder %s28, 3
      %p156 = por %p154, %p155
      %p157 = scmp.ne.s32.totalorder %s148, %s149
      %p158 = scmp.eq.s32.totalorder %s28, 0
      %p159 = por %p157, %p158
      %p160 = scmp.ne.s32.totalorder %s148, %s149
      %p161 = scmp.eq.s32.totalorder %s29, 3
      %p162 = por %p160, %p161
      %p164 = scmp.ne.s32.totalorder %s149, %s163
      %p165 = scmp.eq.s32.totalorder %s29, 0
      %p166 = por %p164, %p165
      %s168 = sadd.s32 %s167, 1
      %p171 = scmp.eq.s32.totalorder %s23, 3
      %p172 = scmp.ne.s32.totalorder %s167, %s169
      %p173 = scmp.eq.s32.totalorder %s23, 0
      %p174 = por %p172, %p173
      %p175 = scmp.ne.s32.totalorder %s167, %s169
      %p176 = scmp.eq.s32.totalorder %s28, 3
      %p177 = por %p175, %p176
      %p178 = scmp.ne.s32.totalorder %s169, %s170
      %p179 = scmp.eq.s32.totalorder %s28, 0
      %p180 = por %p178, %p179
      %p181 = scmp.ne.s32.totalorder %s169, %s170
      %p182 = scmp.eq.s32.totalorder %s29, 3
      %p183 = por %p181, %p182
      %p185 = scmp.ne.s32.totalorder %s170, %s184
      %p186 = scmp.eq.s32.totalorder %s29, 0
      %p187 = por %p185, %p186
      %s188 = ssub.s32 %s23, %s30
      %p189 = scmp.eq.s32.totalorder %s188, 0
      %s191 = sadd.s32 %s190, 1
      %s192 = scalar_select %p189, %s190, %s191
      %p195 = pneg %p189
      %p196 = scmp.eq.s32.totalorder %s23, 3
      %p197 = por %p195, %p196
      %p198 = scmp.ne.s32.totalorder %s190, %s193
      %p199 = scmp.eq.s32.totalorder %s23, 0
      %p200 = por %p198, %p199
      %p201 = scmp.ne.s32.totalorder %s190, %s193
      %p202 = scmp.eq.s32.totalorder %s28, 3
      %p203 = por %p201, %p202
      %p204 = scmp.ne.s32.totalorder %s193, %s194
      %p205 = scmp.eq.s32.totalorder %s28, 0
      %p206 = por %p204, %p205
      %p207 = scmp.ne.s32.totalorder %s193, %s194
      %p208 = scmp.eq.s32.totalorder %s29, 3
      %p209 = por %p207, %p208
      %p211 = scmp.ne.s32.totalorder %s194, %s210
      %p212 = scmp.eq.s32.totalorder %s29, 0
      %p213 = por %p211, %p212
      %p214 = scmp.le.s32.totalorder 1, %s23
      %p215 = scmp.lt.s32.totalorder %s23, 5
      %p216 = pnand %p214, %p215
      %p217 = pneg %p216
      // Predicated region
      $region9: #{tpu_custom_call.1} parent=5 // pred_check
        _
      $region10: #{tpu_custom_call.1} parent=5 // pred_check_branch
        %219 = sbr.rel (%p216) target = $region12
      $region11: #{tpu_custom_call.1} parent=5 // pred_region
        %s220 = ssub.s32 %s23, 1
        // Predicated region
        $region13: #{tpu_custom_call.1} parent=11 // pred_check
          %p221 = pneg %p96
        $region14: #{tpu_custom_call.1} parent=11 // pred_check_branch
          %223 = sbr.rel (%p221) target = $region16
        $region15: #{tpu_custom_call.1} parent=11 // pred_region
          %s225 = ssub.s32 1024, 1024
          %226 = vsyncadd [#allocation6], %s225
          %s227 = sshll.u32 [#allocation7], 4
          %s228 = int_to_ptr.vmem [resolvable:$true] %s227
          %233 = dma.hbm_to_vmem [thread:$0]  %s2, 1024, %s228, [#allocation6], 64, 64, 4
        $region16: #{tpu_custom_call.1} parent=11 // pred_fallthru
          _
        // Predicated region
        $region17: #{tpu_custom_call.1} parent=11 // pred_check
          %p234 = pneg %p117
        $region18: #{tpu_custom_call.1} parent=11 // pred_check_branch
          %236 = sbr.rel (%p234) target = $region20
        $region19: #{tpu_custom_call.1} parent=11 // pred_region
          %s238 = ssub.s32 1024, 1024
          %239 = vsyncadd [#allocation9], %s238
          %s240 = sshll.u32 [#allocation8], 4
          %s241 = int_to_ptr.vmem [resolvable:$true] %s240
          %246 = dma.hbm_to_vmem [thread:$0]  %s3, 1024, %s241, [#allocation9], 64, 64, 4
        $region20: #{tpu_custom_call.1} parent=11 // pred_fallthru
          _
        // Predicated region
        $region21: #{tpu_custom_call.1} parent=11 // pred_check
          %p247 = pneg %p138
        $region22: #{tpu_custom_call.1} parent=11 // pred_check_branch
          %249 = sbr.rel (%p247) target = $region24
        $region23: #{tpu_custom_call.1} parent=11 // pred_region
          _
        $region24: #{tpu_custom_call.1} parent=11 // pred_fallthru
          _
        // Predicated region
        $region25: #{tpu_custom_call.1} parent=11 // pred_check
          %p250 = pneg %p159
        $region26: #{tpu_custom_call.1} parent=11 // pred_check_branch
          %252 = sbr.rel (%p250) target = $region28
        $region27: #{tpu_custom_call.1} parent=11 // pred_region
          _
        $region28: #{tpu_custom_call.1} parent=11 // pred_fallthru
          _
        // Predicated region
        $region29: #{tpu_custom_call.1} parent=11 // pred_check
          %p253 = pneg %p180
        $region30: #{tpu_custom_call.1} parent=11 // pred_check_branch
          %255 = sbr.rel (%p253) target = $region32
        $region31: #{tpu_custom_call.1} parent=11 // pred_region
          _
        $region32: #{tpu_custom_call.1} parent=11 // pred_fallthru
          _
      $region12: #{tpu_custom_call.1} parent=5 // pred_fallthru
        _
      %p256 = scmp.lt.s32.totalorder %s23, 4
      // Predicated region
      $region33: #{tpu_custom_call.1} parent=5 // pred_check
        %p257 = pneg %p256
      $region34: #{tpu_custom_call.1} parent=5 // pred_check_branch
        %259 = sbr.rel (%p257) target = $region36
      $region35: #{tpu_custom_call.1} parent=5 // pred_region
        // Predicated region
        $region37: #{tpu_custom_call.1} parent=35 // pred_check
          %p260 = pneg %p43
        $region38: #{tpu_custom_call.1} parent=35 // pred_check_branch
          %262 = sbr.rel (%p260) target = $region40
        $region39: #{tpu_custom_call.1} parent=35 // pred_region
          %s263 = sand.u32 %s33, 1
          %s264 = scalar_lea.sflag [#allocation3], %s263
          %s265 = sand.u32 %s33, 1
          %s266 = smul.addr %s265, 64
          %s267 = scalar_lea.vmem [#allocation2], %s266
          %s268 = smul.u32 8, %s23
          %s270 = ssub.s32 1024, 1024
          %271 = vsyncadd %s264, %s270
          %s272 = smul.addr %s268, 2
          %s273 = smul.addr %s272, 64
          %s274 = scalar_lea.hbm %s0, %s273
          %s275 = sshll.u32 %s267, 4
          %s276 = int_to_ptr.vmem [resolvable:$true] %s275
          %281 = dma.hbm_to_vmem [thread:$0]  %s274, 1024, %s276, %s264, 64, 64, 4
        $region40: #{tpu_custom_call.1} parent=35 // pred_fallthru
          _
        // Predicated region
        $region41: #{tpu_custom_call.1} parent=35 // pred_check
          %p282 = pneg %p69
        $region42: #{tpu_custom_call.1} parent=35 // pred_check_branch
          %284 = sbr.rel (%p282) target = $region44
        $region43: #{tpu_custom_call.1} parent=35 // pred_region
          %s285 = sand.u32 %s23, 1
          %s286 = scalar_lea.sflag [#allocation6], %s285
          %s287 = sand.u32 %s59, 1
          %s288 = smul.addr %s287, 8
          %s289 = scalar_lea.vmem [#allocation5], %s288
          %s291 = ssub.s32 128, 128
          %292 = vsyncadd %s286, %s291
          %s293 = smul.addr %s23, 128
          %s294 = scalar_lea.hbm %s1, %s293
          %s296 = sshll.u32 %s289, 4
          %s297 = int_to_ptr.vmem [resolvable:$true] %s296
          %299 = dma.hbm_to_vmem [thread:$0]  %s294, 128, %s297, %s286
        $region44: #{tpu_custom_call.1} parent=35 // pred_fallthru
          _
      $region36: #{tpu_custom_call.1} parent=5 // pred_fallthru
        _
      %p300 = scmp.le.s32.totalorder 1, %s23
      %p301 = scmp.lt.s32.totalorder %s23, 5
      %p302 = pnand %p300, %p301
      %p303 = pneg %p302
      // Predicated region
      $region45: #{tpu_custom_call.1} parent=5 // pred_check
        _
      $region46: #{tpu_custom_call.1} parent=5 // pred_check_branch
        %305 = sbr.rel (%p302) target = $region48
      $region47: #{tpu_custom_call.1} parent=5 // pred_region
        %s306 = ssub.s32 %s23, 1
        %s307 = sand.u32 %s36, 1
        %s308 = scalar_lea.sflag [#allocation3], %s307
        %s309 = sand.u32 %s36, 1
        %s310 = smul.addr %s309, 64
        %s311 = scalar_lea.vmem [#allocation2], %s310
        // Predicated region
        $region49: #{tpu_custom_call.1} parent=47 // pred_check
          %p312 = pneg %p49
        $region50: #{tpu_custom_call.1} parent=47 // pred_check_branch
          %314 = sbr.rel (%p312) target = $region52
        $region51: #{tpu_custom_call.1} parent=47 // pred_region
          %315 = dma.done %s308, 1024
        $region52: #{tpu_custom_call.1} parent=47 // pred_fallthru
          _
        %s316 = sand.u32 %s28, 1
        %s317 = scalar_lea.sflag [#allocation6], %s316
        %s318 = sand.u32 %s62, 1
        %s319 = smul.addr %s318, 8
        %s320 = scalar_lea.vmem [#allocation5], %s319
        // Predicated region
        $region53: #{tpu_custom_call.1} parent=47 // pred_check
          %p321 = pneg %p75
        $region54: #{tpu_custom_call.1} parent=47 // pred_check_branch
          %323 = sbr.rel (%p321) target = $region56
        $region55: #{tpu_custom_call.1} parent=47 // pred_region
          %324 = dma.done %s317, 128
        $region56: #{tpu_custom_call.1} parent=47 // pred_fallthru
          _
        // Predicated region
        $region57: #{tpu_custom_call.1} parent=47 // pred_check
          %p325 = pneg %p96
        $region58: #{tpu_custom_call.1} parent=47 // pred_check_branch
          %327 = sbr.rel (%p325) target = $region60
        $region59: #{tpu_custom_call.1} parent=47 // pred_region
          %328 = dma.done [#allocation6], 1024
        $region60: #{tpu_custom_call.1} parent=47 // pred_fallthru
          _
        // Predicated region
        $region61: #{tpu_custom_call.1} parent=47 // pred_check
          %p329 = pneg %p117
        $region62: #{tpu_custom_call.1} parent=47 // pred_check_branch
          %331 = sbr.rel (%p329) target = $region64
        $region63: #{tpu_custom_call.1} parent=47 // pred_region
          %332 = dma.done [#allocation9], 1024
        $region64: #{tpu_custom_call.1} parent=47 // pred_fallthru
          _
        %s333 = sand.u32 %s36, 1
        %s334 = scalar_lea.sflag [#allocation3], %s333
        %s335 = sand.u32 %s36, 1
        %s336 = smul.addr %s335, 64
        %s337 = scalar_lea.vmem [#allocation2], %s336
        %p338 = pneg %p49
        %p339 = pneg %p46
        %s340 = sand.u32 %s28, 1
        %s341 = scalar_lea.sflag [#allocation6], %s340
        %s342 = sand.u32 %s62, 1
        %s343 = smul.addr %s342, 8
        %s344 = scalar_lea.vmem [#allocation5], %s343
        %p345 = pneg %p75
        %p346 = pneg %p72
        %p347 = pneg %p96
        %p348 = pneg %p93
        %p349 = pneg %p117
        %p350 = pneg %p114
        %p351 = pneg %p138
        %p352 = pneg %p135
        %p353 = pneg %p159
        %p354 = pneg %p156
        %p355 = pneg %p180
        %p356 = pneg %p177
        %p357 = pneg %p206
        %p358 = pneg %p203
        %s359 = sand.u32 %s193, 1
        %s360 = scalar_lea.sflag [#allocation4], %s359
        %s361 = sand.u32 %s193, 1
        %s362 = smul.addr %s361, 8
        %s363 = scalar_lea.vmem [#allocation10], %s362
        %s364 = smul.u32 8, %s28
        %v366 = vld [vmem:[%s311] sm:$0xf]
        %v367 = vld [vmem:[%s311 + $0x4] sm:$0xf]
        %v368 = vld [vmem:[%s311 + $0x8] sm:$0xf]
        %v369 = vld [vmem:[%s311 + $0xc] sm:$0xf]
        %v370 = vld [vmem:[%s311 + $0x10] sm:$0xf]
        %v371 = vld [vmem:[%s311 + $0x14] sm:$0xf]
        %v372 = vld [vmem:[%s311 + $0x18] sm:$0xf]
        %v373 = vld [vmem:[%s311 + $0x1c] sm:$0xf]
        %v374 = vld [vmem:[%s311 + $0x20] sm:$0xf]
        %v375 = vld [vmem:[%s311 + $0x24] sm:$0xf]
        %v376 = vld [vmem:[%s311 + $0x28] sm:$0xf]
        %v377 = vld [vmem:[%s311 + $0x2c] sm:$0xf]
        %v378 = vld [vmem:[%s311 + $0x30] sm:$0xf]
        %v379 = vld [vmem:[%s311 + $0x34] sm:$0xf]
        %v380 = vld [vmem:[%s311 + $0x38] sm:$0xf]
        %v381 = vld [vmem:[%s311 + $0x3c] sm:$0xf]
        %v382 = vld [vmem:[%s320] sm:$0xff]
        %v383 = vld [vmem:[#allocation7] sm:$0xf]
        %v384 = vld [vmem:[#allocation7 + $0x4] sm:$0xf]
        %v385 = vld [vmem:[#allocation7 + $0x8] sm:$0xf]
        %v386 = vld [vmem:[#allocation7 + $0xc] sm:$0xf]
        %v387 = vld [vmem:[#allocation7 + $0x10] sm:$0xf]
        %v388 = vld [vmem:[#allocation7 + $0x14] sm:$0xf]
        %v389 = vld [vmem:[#allocation7 + $0x18] sm:$0xf]
        %v390 = vld [vmem:[#allocation7 + $0x1c] sm:$0xf]
        %v391 = vld [vmem:[#allocation7 + $0x20] sm:$0xf]
        %v392 = vld [vmem:[#allocation7 + $0x24] sm:$0xf]
        %v393 = vld [vmem:[#allocation7 + $0x28] sm:$0xf]
        %v394 = vld [vmem:[#allocation7 + $0x2c] sm:$0xf]
        %v395 = vld [vmem:[#allocation7 + $0x30] sm:$0xf]
        %v396 = vld [vmem:[#allocation7 + $0x34] sm:$0xf]
        %v397 = vld [vmem:[#allocation7 + $0x38] sm:$0xf]
        %v398 = vld [vmem:[#allocation7 + $0x3c] sm:$0xf]
        %v415 = vunpack.c.l.b16 %v366
        %v416 = vunpack.c.l.b16 %v367
        %v417 = vunpack.c.l.b16 %v368
        %v418 = vunpack.c.l.b16 %v369
        %v419 = vunpack.c.l.b16 %v370
        %v420 = vunpack.c.l.b16 %v371
        %v421 = vunpack.c.l.b16 %v372
        %v422 = vunpack.c.l.b16 %v373
        %v423 = vunpack.c.l.b16 %v374
        %v424 = vunpack.c.l.b16 %v375
        %v425 = vunpack.c.l.b16 %v376
        %v426 = vunpack.c.l.b16 %v377
        %v427 = vunpack.c.l.b16 %v378
        %v428 = vunpack.c.l.b16 %v379
        %v429 = vunpack.c.l.b16 %v380
        %v430 = vunpack.c.l.b16 %v381
        %v431 = vpack.c.b16 %v416, %v415
        %v432 = vpack.c.b16 %v418, %v417
        %v433 = vpack.c.b16 %v420, %v419
        %v434 = vpack.c.b16 %v422, %v421
        %v435 = vpack.c.b16 %v424, %v423
        %v436 = vpack.c.b16 %v426, %v425
        %v437 = vpack.c.b16 %v428, %v427
        %v438 = vpack.c.b16 %v430, %v429
        %v463 = vunpack.c.l.b16 %v383
        %v464 = vunpack.c.l.b16 %v384
        %v465 = vunpack.c.l.b16 %v385
        %v466 = vunpack.c.l.b16 %v386
        %v467 = vunpack.c.l.b16 %v387
        %v468 = vunpack.c.l.b16 %v388
        %v469 = vunpack.c.l.b16 %v389
        %v470 = vunpack.c.l.b16 %v390
        %v471 = vunpack.c.l.b16 %v391
        %v472 = vunpack.c.l.b16 %v392
        %v473 = vunpack.c.l.b16 %v393
        %v474 = vunpack.c.l.b16 %v394
        %v475 = vunpack.c.l.b16 %v395
        %v476 = vunpack.c.l.b16 %v396
        %v477 = vunpack.c.l.b16 %v397
        %v478 = vunpack.c.l.b16 %v398
        %v479 = vpack.c.b16 %v464, %v463
        %v480 = vpack.c.b16 %v466, %v465
        %v481 = vpack.c.b16 %v468, %v467
        %v482 = vpack.c.b16 %v470, %v469
        %v483 = vpack.c.b16 %v472, %v471
        %v484 = vpack.c.b16 %v474, %v473
        %v485 = vpack.c.b16 %v476, %v475
        %v486 = vpack.c.b16 %v478, %v477
        %495 = vmatprep.subr.bf16.mxu0 0
        %496 = vmatpush1.bf16.msra.mxu0 %v479
        %497 = vmatprep.subr.bf16.mxu0 0
        %498 = vmatpush1.bf16.msra.mxu0 %v480
        %499 = vmatprep.subr.bf16.mxu0 0
        %500 = vmatpush1.bf16.msra.mxu0 %v481
        %501 = vmatprep.subr.bf16.mxu0 0
        %502 = vmatpush1.bf16.msra.mxu0 %v482
        %503 = vmatprep.subr.bf16.mxu0 0
        %504 = vmatpush1.bf16.msra.mxu0 %v483
        %505 = vmatprep.subr.bf16.mxu0 0
        %506 = vmatpush1.bf16.msra.mxu0 %v484
        %507 = vmatprep.subr.bf16.mxu0 0
        %508 = vmatpush1.bf16.msra.mxu0 %v485
        %509 = vmatprep.subr.bf16.mxu0 0
        %510 = vmatpush1.bf16.msra.mxu0 %v486
        %511 = vmatprep.subr.bf16.mxu0 0
        %512 = vmatpush1.bf16.msra.mxu0 0
        %513 = vmatprep.subr.bf16.mxu0 0
        %514 = vmatpush1.bf16.msra.mxu0 0
        %515 = vmatprep.subr.bf16.mxu0 0
        %516 = vmatpush1.bf16.msra.mxu0 0
        %517 = vmatprep.subr.bf16.mxu0 0
        %518 = vmatpush1.bf16.msra.mxu0 0
        %519 = vmatprep.subr.bf16.mxu0 0
        %520 = vmatpush1.bf16.msra.mxu0 0
        %521 = vmatprep.subr.bf16.mxu0 0
        %522 = vmatpush1.bf16.msra.mxu0 0
        %523 = vmatprep.subr.bf16.mxu0 0
        %524 = vmatpush1.bf16.msra.mxu0 0
        %525 = vmatprep.subr.bf16.mxu0 0
        %526 = vmatpush1.bf16.msra.mxu0 0
        %527 = vmatprep.mubr.bf16.mxu0 0
        %528 = vmatmul.mubr.bf16.gmra.mrb[0].mxu0 %v431
        %v529 = vpop.f32.mrb[0].mxu0
        %v530 = vadd.f32 0.0, %v529
        %v531 = vpop.f32.mrb[0].mxu0
        %v532 = vpop.f32.mrb[0].mxu0
        %v533 = vadd.f32 0.0, %v532
        %v534 = vpop.f32.mrb[0].mxu0
        %535 = vmatprep.mubr.bf16.mxu0 0
        %536 = vmatmul.mubr.bf16.gmra.mrb[0].mxu0 %v432
        %v537 = vpop.f32.mrb[0].mxu0
        %v538 = vadd.f32 0.0, %v537
        %v539 = vpop.f32.mrb[0].mxu0
        %v540 = vpop.f32.mrb[0].mxu0
        %v541 = vadd.f32 0.0, %v540
        %v542 = vpop.f32.mrb[0].mxu0
        %543 = vmatprep.mubr.bf16.mxu0 0
        %544 = vmatmul.mubr.bf16.gmra.mrb[0].mxu0 %v433
        %v545 = vpop.f32.mrb[0].mxu0
        %v546 = vadd.f32 0.0, %v545
        %v547 = vpop.f32.mrb[0].mxu0
        %v548 = vpop.f32.mrb[0].mxu0
        %v549 = vadd.f32 0.0, %v548
        %v550 = vpop.f32.mrb[0].mxu0
        %551 = vmatprep.mubr.bf16.mxu0 0
        %552 = vmatmul.mubr.bf16.gmra.mrb[0].mxu0 %v434
        %v553 = vpop.f32.mrb[0].mxu0
        %v554 = vadd.f32 0.0, %v553
        %v555 = vpop.f32.mrb[0].mxu0
        %v556 = vpop.f32.mrb[0].mxu0
        %v557 = vadd.f32 0.0, %v556
        %v558 = vpop.f32.mrb[0].mxu0
        %559 = vmatprep.mubr.bf16.mxu0 0
        %560 = vmatmul.mubr.bf16.gmra.mrb[0].mxu0 %v435
        %v561 = vpop.f32.mrb[0].mxu0
        %v562 = vadd.f32 0.0, %v561
        %v563 = vpop.f32.mrb[0].mxu0
        %v564 = vpop.f32.mrb[0].mxu0
        %v565 = vadd.f32 0.0, %v564
        %v566 = vpop.f32.mrb[0].mxu0
        %567 = vmatprep.mubr.bf16.mxu0 0
        %568 = vmatmul.mubr.bf16.gmra.mrb[0].mxu0 %v436
        %v569 = vpop.f32.mrb[0].mxu0
        %v570 = vadd.f32 0.0, %v569
        %v571 = vpop.f32.mrb[0].mxu0
        %v572 = vpop.f32.mrb[0].mxu0
        %v573 = vadd.f32 0.0, %v572
        %v574 = vpop.f32.mrb[0].mxu0
        %575 = vmatprep.mubr.bf16.mxu0 0
        %576 = vmatmul.mubr.bf16.gmra.mrb[0].mxu0 %v437
        %v577 = vpop.f32.mrb[0].mxu0
        %v578 = vadd.f32 0.0, %v577
        %v579 = vpop.f32.mrb[0].mxu0
        %v580 = vpop.f32.mrb[0].mxu0
        %v581 = vadd.f32 0.0, %v580
        %v582 = vpop.f32.mrb[0].mxu0
        %583 = vmatprep.mubr.bf16.mxu0 0
        %584 = vmatmul.mubr.bf16.gmra.mrb[0].mxu0 %v438
        %v585 = vpop.f32.mrb[0].mxu0
        %v586 = vadd.f32 0.0, %v585
        %v587 = vpop.f32.mrb[0].mxu0
        %v588 = vpop.f32.mrb[0].mxu0
        %v589 = vadd.f32 0.0, %v588
        %v590 = vpop.f32.mrb[0].mxu0
        %591 = vdwg.mxu0
        %v592 = vpack.c.bf16 %v382, %v382
        %v593 = vld [vmem:[#allocation8] sm:$0xf]
        %v594 = vld [vmem:[#allocation8 + $0x4] sm:$0xf]
        %v595 = vld [vmem:[#allocation8 + $0x8] sm:$0xf]
        %v596 = vld [vmem:[#allocation8 + $0xc] sm:$0xf]
        %v597 = vld [vmem:[#allocation8 + $0x10] sm:$0xf]
        %v598 = vld [vmem:[#allocation8 + $0x14] sm:$0xf]
        %v599 = vld [vmem:[#allocation8 + $0x18] sm:$0xf]
        %v600 = vld [vmem:[#allocation8 + $0x1c] sm:$0xf]
        %v601 = vld [vmem:[#allocation8 + $0x20] sm:$0xf]
        %v602 = vld [vmem:[#allocation8 + $0x24] sm:$0xf]
        %v603 = vld [vmem:[#allocation8 + $0x28] sm:$0xf]
        %v604 = vld [vmem:[#allocation8 + $0x2c] sm:$0xf]
        %v605 = vld [vmem:[#allocation8 + $0x30] sm:$0xf]
        %v606 = vld [vmem:[#allocation8 + $0x34] sm:$0xf]
        %v607 = vld [vmem:[#allocation8 + $0x38] sm:$0xf]
        %v608 = vld [vmem:[#allocation8 + $0x3c] sm:$0xf]
        %v609 = vld [vmem:[%s4] sm:$0x1]
        %v611 = vlaneseq
        %v612 = vshrl.u32 %v611, 7
        %v613 = vsub.s32 0, %v612
        %v614 = vrot.slane %v609, %v613
        %v632 = vunpack.c.l.b16 %v593
        %v633 = vunpack.c.l.b16 %v594
        %v634 = vunpack.c.l.b16 %v595
        %v635 = vunpack.c.l.b16 %v596
        %v636 = vunpack.c.l.b16 %v597
        %v637 = vunpack.c.l.b16 %v598
        %v638 = vunpack.c.l.b16 %v599
        %v639 = vunpack.c.l.b16 %v600
        %v640 = vunpack.c.l.b16 %v601
        %v641 = vunpack.c.l.b16 %v602
        %v642 = vunpack.c.l.b16 %v603
        %v643 = vunpack.c.l.b16 %v604
        %v644 = vunpack.c.l.b16 %v605
        %v645 = vunpack.c.l.b16 %v606
        %v646 = vunpack.c.l.b16 %v607
        %v647 = vunpack.c.l.b16 %v608
        %v648 = vpack.c.b16 %v633, %v632
        %v649 = vpack.c.b16 %v635, %v634
        %v650 = vpack.c.b16 %v637, %v636
        %v651 = vpack.c.b16 %v639, %v638
        %v652 = vpack.c.b16 %v641, %v640
        %v653 = vpack.c.b16 %v643, %v642
        %v654 = vpack.c.b16 %v645, %v644
        %v655 = vpack.c.b16 %v647, %v646
        %664 = vmatprep.subr.bf16.mxu0 0
        %665 = vmatpush1.bf16.msra.mxu0 %v648
        %666 = vmatprep.subr.bf16.mxu0 0
        %667 = vmatpush1.bf16.msra.mxu0 %v649
        %668 = vmatprep.subr.bf16.mxu0 0
        %669 = vmatpush1.bf16.msra.mxu0 %v650
        %670 = vmatprep.subr.bf16.mxu0 0
        %671 = vmatpush1.bf16.msra.mxu0 %v651
        %672 = vmatprep.subr.bf16.mxu0 0
        %673 = vmatpush1.bf16.msra.mxu0 %v652
        %674 = vmatprep.subr.bf16.mxu0 0
        %675 = vmatpush1.bf16.msra.mxu0 %v653
        %676 = vmatprep.subr.bf16.mxu0 0
        %677 = vmatpush1.bf16.msra.mxu0 %v654
        %678 = vmatprep.subr.bf16.mxu0 0
        %679 = vmatpush1.bf16.msra.mxu0 %v655
        %680 = vmatprep.subr.bf16.mxu0 0
        %681 = vmatpush1.bf16.msra.mxu0 0
        %682 = vmatprep.subr.bf16.mxu0 0
        %683 = vmatpush1.bf16.msra.mxu0 0
        %684 = vmatprep.subr.bf16.mxu0 0
        %685 = vmatpush1.bf16.msra.mxu0 0
        %686 = vmatprep.subr.bf16.mxu0 0
        %687 = vmatpush1.bf16.msra.mxu0 0
        %688 = vmatprep.subr.bf16.mxu0 0
        %689 = vmatpush1.bf16.msra.mxu0 0
        %690 = vmatprep.subr.bf16.mxu0 0
        %691 = vmatpush1.bf16.msra.mxu0 0
        %692 = vmatprep.subr.bf16.mxu0 0
        %693 = vmatpush1.bf16.msra.mxu0 0
        %694 = vmatprep.subr.bf16.mxu0 0
        %695 = vmatpush1.bf16.msra.mxu0 0
        %696 = vmatprep.mubr.bf16.mxu0 0
        %697 = vmatmul.mubr.bf16.gmra.mrb[0].mxu0 %v592
        %v698 = vpop.f32.mrb[0].mxu0
        %v699 = vadd.f32 %v614, %v698
        %v700 = vpop.f32.mrb[0].mxu0
        %v701 = vpop.f32.mrb[0].mxu0
        %v702 = vpop.f32.mrb[0].mxu0
        %703 = vdwg.mxu0
        %v705 = vcombine.high %v699, %v699
        %v707 = vunpack.c.l.s4 1966171168
        %v708 = vunpack.c.0.s8 %v707
        %v709 = vlaneseq
        %v710 = vshrl.u32 %v709, 7
        %v711 = vsub.s32 %v708, %v710
        %v712 = vrot.slane %v699, %v711
        %v714 = vunpack.c.l.s4 1966171168
        %v715 = vunpack.c.0.s8 %v714
        %v716 = vlaneseq
        %v717 = vshrl.u32 %v716, 7
        %v718 = vsub.s32 %v715, %v717
        %v719 = vrot.slane %v705, %v718
        %v720 = vcombine.high %v712, %v712
        %v721 = vcombine.high %v719, %v719
        %v723 = vunpack.c.l.s4 1966171168
        %v724 = vunpack.c.0.s8 %v723
        %v725 = vlaneseq
        %v726 = vshrl.u32 %v725, 7
        %v727 = vsub.s32 %v724, %v726
        %v728 = vrot.slane %v712, %v727
        %v730 = vunpack.c.l.s4 1966171168
        %v731 = vunpack.c.0.s8 %v730
        %v732 = vlaneseq
        %v733 = vshrl.u32 %v732, 7
        %v734 = vsub.s32 %v731, %v733
        %v735 = vrot.slane %v719, %v734
        %v737 = vunpack.c.l.s4 1966171168
        %v738 = vunpack.c.0.s8 %v737
        %v739 = vlaneseq
        %v740 = vshrl.u32 %v739, 7
        %v741 = vsub.s32 %v738, %v740
        %v742 = vrot.slane %v720, %v741
        %v744 = vunpack.c.l.s4 1966171168
        %v745 = vunpack.c.0.s8 %v744
        %v746 = vlaneseq
        %v747 = vshrl.u32 %v746, 7
        %v748 = vsub.s32 %v745, %v747
        %v749 = vrot.slane %v721, %v748
        %v750 = vcombine.high %v728, %v728
        %v751 = vcombine.high %v735, %v735
        %v752 = vcombine.high %v742, %v742
        %v753 = vcombine.high %v749, %v749
        %v754 = vlaneseq
        %v755 = vshrl.u32 %v754, 7
        %v756 = vsub.s32 0, %v755
        %v757 = vrot.slane %v728, %v756
        %v758 = vlaneseq
        %v759 = vshrl.u32 %v758, 7
        %v760 = vsub.s32 0, %v759
        %v761 = vrot.slane %v742, %v760
        %v762 = vlaneseq
        %v763 = vshrl.u32 %v762, 7
        %v764 = vsub.s32 0, %v763
        %v765 = vrot.slane %v750, %v764
        %v766 = vlaneseq
        %v767 = vshrl.u32 %v766, 7
        %v768 = vsub.s32 0, %v767
        %v769 = vrot.slane %v752, %v768
        %v770 = vlaneseq
        %v771 = vshrl.u32 %v770, 7
        %v772 = vsub.s32 0, %v771
        %v773 = vrot.slane %v735, %v772
        %v774 = vlaneseq
        %v775 = vshrl.u32 %v774, 7
        %v776 = vsub.s32 0, %v775
        %v777 = vrot.slane %v749, %v776
        %v778 = vlaneseq
        %v779 = vshrl.u32 %v778, 7
        %v780 = vsub.s32 0, %v779
        %v781 = vrot.slane %v751, %v780
        %v782 = vlaneseq
        %v783 = vshrl.u32 %v782, 7
        %v784 = vsub.s32 0, %v783
        %v785 = vrot.slane %v753, %v784
        %v794 = vadd.f32 %v757, %v530
        %v795 = vadd.f32 %v757, %v533
        %v796 = vadd.f32 %v761, %v538
        %v797 = vadd.f32 %v761, %v541
        %v798 = vadd.f32 %v765, %v546
        %v799 = vadd.f32 %v765, %v549
        %v800 = vadd.f32 %v769, %v554
        %v801 = vadd.f32 %v769, %v557
        %v802 = vadd.f32 %v773, %v562
        %v803 = vadd.f32 %v773, %v565
        %v804 = vadd.f32 %v777, %v570
        %v805 = vadd.f32 %v777, %v573
        %v806 = vadd.f32 %v781, %v578
        %v807 = vadd.f32 %v781, %v581
        %v808 = vadd.f32 %v785, %v586
        %v809 = vadd.f32 %v785, %v589
        %v810 = vtanh.pop %v794
        %v811 = vtanh.pop %v795
        %v812 = vtanh.pop %v796
        %v813 = vtanh.pop %v797
        %v814 = vtanh.pop %v798
        %v815 = vtanh.pop %v799
        %v816 = vtanh.pop %v800
        %v817 = vtanh.pop %v801
        %v818 = vtanh.pop %v802
        %v819 = vtanh.pop %v803
        %v820 = vtanh.pop %v804
        %v821 = vtanh.pop %v805
        %v822 = vtanh.pop %v806
        %v823 = vtanh.pop %v807
        %v824 = vtanh.pop %v808
        %v825 = vtanh.pop %v809
        %v826 = vld [vmem:[%s5] sm:$0x1]
        %v828 = vlaneseq
        %v829 = vshrl.u32 %v828, 7
        %v830 = vsub.s32 0, %v829
        %v831 = vrot.slane %v826, %v830
        %v833 = vmul.f32 %v810, %v831
        %v834 = vmul.f32 %v811, %v831
        %v835 = vmul.f32 %v812, %v831
        %v836 = vmul.f32 %v813, %v831
        %v837 = vmul.f32 %v814, %v831
        %v838 = vmul.f32 %v815, %v831
        %v839 = vmul.f32 %v816, %v831
        %v840 = vmul.f32 %v817, %v831
        %v841 = vmul.f32 %v818, %v831
        %v842 = vmul.f32 %v819, %v831
        %v843 = vmul.f32 %v820, %v831
        %v844 = vmul.f32 %v821, %v831
        %v845 = vmul.f32 %v822, %v831
        %v846 = vmul.f32 %v823, %v831
        %v847 = vmul.f32 %v824, %v831
        %v848 = vmul.f32 %v825, %v831
        %849 = vadd.xlane.f32.xlu0 %v833
        %v850 = vpop.xlane.xlu0 %849
        %851 = vadd.xlane.f32.xlu0 %v834
        %v852 = vpop.xlane.xlu0 %851
        %853 = vadd.xlane.f32.xlu0 %v835
        %v854 = vpop.xlane.xlu0 %853
        %855 = vadd.xlane.f32.xlu0 %v836
        %v856 = vpop.xlane.xlu0 %855
        %857 = vadd.xlane.f32.xlu0 %v837
        %v858 = vpop.xlane.xlu0 %857
        %859 = vadd.xlane.f32.xlu0 %v838
        %v860 = vpop.xlane.xlu0 %859
        %861 = vadd.xlane.f32.xlu0 %v839
        %v862 = vpop.xlane.xlu0 %861
        %863 = vadd.xlane.f32.xlu0 %v840
        %v864 = vpop.xlane.xlu0 %863
        %865 = vadd.xlane.f32.xlu0 %v841
        %v866 = vpop.xlane.xlu0 %865
        %867 = vadd.xlane.f32.xlu0 %v842
        %v868 = vpop.xlane.xlu0 %867
        %869 = vadd.xlane.f32.xlu0 %v843
        %v870 = vpop.xlane.xlu0 %869
        %871 = vadd.xlane.f32.xlu0 %v844
        %v872 = vpop.xlane.xlu0 %871
        %873 = vadd.xlane.f32.xlu0 %v845
        %v874 = vpop.xlane.xlu0 %873
        %875 = vadd.xlane.f32.xlu0 %v846
        %v876 = vpop.xlane.xlu0 %875
        %877 = vadd.xlane.f32.xlu0 %v847
        %v878 = vpop.xlane.xlu0 %877
        %879 = vadd.xlane.f32.xlu0 %v848
        %v880 = vpop.xlane.xlu0 %879
        %v881 = vld [vmem:[%s6] sm:$0xff]
        %v882 = vld [vmem:[%s6 + $0x8] sm:$0xff]
        %v883 = vadd.f32 %v850, %v881
        %v884 = vadd.f32 %v852, %v882
        %v885 = vadd.f32 %v854, %v881
        %v886 = vadd.f32 %v856, %v882
        %v887 = vadd.f32 %v858, %v881
        %v888 = vadd.f32 %v860, %v882
        %v889 = vadd.f32 %v862, %v881
        %v890 = vadd.f32 %v864, %v882
        %v891 = vadd.f32 %v866, %v881
        %v892 = vadd.f32 %v868, %v882
        %v893 = vadd.f32 %v870, %v881
        %v894 = vadd.f32 %v872, %v882
        %v895 = vadd.f32 %v874, %v881
        %v896 = vadd.f32 %v876, %v882
        %v897 = vadd.f32 %v878, %v881
        %v898 = vadd.f32 %v880, %v882
        %vm899 = vcmask 7168
        %v900 = vsel %vm899, %v883, -inf
        %v901 = vsel %vm899, %v884, -inf
        %v902 = vmax.f32 %v900, %v901
        %v903 = vrot.slane %v902, 4
        %v904 = vmax.f32 %v902, %v903
        %v905 = vrot.slane %v904, 2
        %v906 = vmax.f32 %v904, %v905
        %v907 = vrot.slane %v906, 1
        %v908 = vmax.f32 %v906, %v907
        %v909 = vsel %vm899, %v885, -inf
        %v910 = vsel %vm899, %v886, -inf
        %v911 = vmax.f32 %v909, %v910
        %v912 = vrot.slane %v911, 4
        %v913 = vmax.f32 %v911, %v912
        %v914 = vrot.slane %v913, 2
        %v915 = vmax.f32 %v913, %v914
        %v916 = vrot.slane %v915, 1
        %v917 = vmax.f32 %v915, %v916
        %v918 = vsel %vm899, %v887, -inf
        %v919 = vsel %vm899, %v888, -inf
        %v920 = vmax.f32 %v918, %v919
        %v921 = vrot.slane %v920, 4
        %v922 = vmax.f32 %v920, %v921
        %v923 = vrot.slane %v922, 2
        %v924 = vmax.f32 %v922, %v923
        %v925 = vrot.slane %v924, 1
        %v926 = vmax.f32 %v924, %v925
        %v927 = vsel %vm899, %v889, -inf
        %v928 = vsel %vm899, %v890, -inf
        %v929 = vmax.f32 %v927, %v928
        %v930 = vrot.slane %v929, 4
        %v931 = vmax.f32 %v929, %v930
        %v932 = vrot.slane %v931, 2
        %v933 = vmax.f32 %v931, %v932
        %v934 = vrot.slane %v933, 1
        %v935 = vmax.f32 %v933, %v934
        %v936 = vsel %vm899, %v891, -inf
        %v937 = vsel %vm899, %v892, -inf
        %v938 = vmax.f32 %v936, %v937
        %v939 = vrot.slane %v938, 4
        %v940 = vmax.f32 %v938, %v939
        %v941 = vrot.slane %v940, 2
        %v942 = vmax.f32 %v940, %v941
        %v943 = vrot.slane %v942, 1
        %v944 = vmax.f32 %v942, %v943
        %v945 = vsel %vm899, %v893, -inf
        %v946 = vsel %vm899, %v894, -inf
        %v947 = vmax.f32 %v945, %v946
        %v948 = vrot.slane %v947, 4
        %v949 = vmax.f32 %v947, %v948
        %v950 = vrot.slane %v949, 2
        %v951 = vmax.f32 %v949, %v950
        %v952 = vrot.slane %v951, 1
        %v953 = vmax.f32 %v951, %v952
        %v954 = vsel %vm899, %v895, -inf
        %v955 = vsel %vm899, %v896, -inf
        %v956 = vmax.f32 %v954, %v955
        %v957 = vrot.slane %v956, 4
        %v958 = vmax.f32 %v956, %v957
        %v959 = vrot.slane %v958, 2
        %v960 = vmax.f32 %v958, %v959
        %v961 = vrot.slane %v960, 1
        %v962 = vmax.f32 %v960, %v961
        %v963 = vsel %vm899, %v897, -inf
        %v964 = vsel %vm899, %v898, -inf
        %v965 = vmax.f32 %v963, %v964
        %v966 = vrot.slane %v965, 4
        %v967 = vmax.f32 %v965, %v966
        %v968 = vrot.slane %v967, 2
        %v969 = vmax.f32 %v967, %v968
        %v970 = vrot.slane %v969, 1
        %v971 = vmax.f32 %v969, %v970
        %v972 = vsub.f32 %v883, %v908
        %v973 = vsub.f32 %v884, %v908
        %v974 = vsub.f32 %v885, %v917
        %v975 = vsub.f32 %v886, %v917
        %v976 = vsub.f32 %v887, %v926
        %v977 = vsub.f32 %v888, %v926
        %v978 = vsub.f32 %v889, %v935
        %v979 = vsub.f32 %v890, %v935
        %v980 = vsub.f32 %v891, %v944
        %v981 = vsub.f32 %v892, %v944
        %v982 = vsub.f32 %v893, %v953
        %v983 = vsub.f32 %v894, %v953
        %v984 = vsub.f32 %v895, %v962
        %v985 = vsub.f32 %v896, %v962
        %v986 = vsub.f32 %v897, %v971
        %v987 = vsub.f32 %v898, %v971
        %v988 = vmul.f32 %v972, 1.442695
        %v989 = vpow.pop %v988
        %v990 = vmul.f32 %v973, 1.442695
        %v991 = vpow.pop %v990
        %v992 = vmul.f32 %v974, 1.442695
        %v993 = vpow.pop %v992
        %v994 = vmul.f32 %v975, 1.442695
        %v995 = vpow.pop %v994
        %v996 = vmul.f32 %v976, 1.442695
        %v997 = vpow.pop %v996
        %v998 = vmul.f32 %v977, 1.442695
        %v999 = vpow.pop %v998
        %v1000 = vmul.f32 %v978, 1.442695
        %v1001 = vpow.pop %v1000
        %v1002 = vmul.f32 %v979, 1.442695
        %v1003 = vpow.pop %v1002
        %v1004 = vmul.f32 %v980, 1.442695
        %v1005 = vpow.pop %v1004
        %v1006 = vmul.f32 %v981, 1.442695
        %v1007 = vpow.pop %v1006
        %v1008 = vmul.f32 %v982, 1.442695
        %v1009 = vpow.pop %v1008
        %v1010 = vmul.f32 %v983, 1.442695
        %v1011 = vpow.pop %v1010
        %v1012 = vmul.f32 %v984, 1.442695
        %v1013 = vpow.pop %v1012
        %v1014 = vmul.f32 %v985, 1.442695
        %v1015 = vpow.pop %v1014
        %v1016 = vmul.f32 %v986, 1.442695
        %v1017 = vpow.pop %v1016
        %v1018 = vmul.f32 %v987, 1.442695
        %v1019 = vpow.pop %v1018
        %v1020 = vsel %vm899, %v989, 0.0
        %v1021 = vsel %vm899, %v991, 0.0
        %v1022 = vadd.f32 %v1020, %v1021
        %v1023 = vrot.slane %v1022, 4
        %v1024 = vadd.f32 %v1022, %v1023
        %v1025 = vrot.slane %v1024, 2
        %v1026 = vadd.f32 %v1024, %v1025
        %v1027 = vrot.slane %v1026, 1
        %v1028 = vadd.f32 %v1026, %v1027
        %v1029 = vsel %vm899, %v993, 0.0
        %v1030 = vsel %vm899, %v995, 0.0
        %v1031 = vadd.f32 %v1029, %v1030
        %v1032 = vrot.slane %v1031, 4
        %v1033 = vadd.f32 %v1031, %v1032
        %v1034 = vrot.slane %v1033, 2
        %v1035 = vadd.f32 %v1033, %v1034
        %v1036 = vrot.slane %v1035, 1
        %v1037 = vadd.f32 %v1035, %v1036
        %v1038 = vsel %vm899, %v997, 0.0
        %v1039 = vsel %vm899, %v999, 0.0
        %v1040 = vadd.f32 %v1038, %v1039
        %v1041 = vrot.slane %v1040, 4
        %v1042 = vadd.f32 %v1040, %v1041
        %v1043 = vrot.slane %v1042, 2
        %v1044 = vadd.f32 %v1042, %v1043
        %v1045 = vrot.slane %v1044, 1
        %v1046 = vadd.f32 %v1044, %v1045
        %v1047 = vsel %vm899, %v1001, 0.0
        %v1048 = vsel %vm899, %v1003, 0.0
        %v1049 = vadd.f32 %v1047, %v1048
        %v1050 = vrot.slane %v1049, 4
        %v1051 = vadd.f32 %v1049, %v1050
        %v1052 = vrot.slane %v1051, 2
        %v1053 = vadd.f32 %v1051, %v1052
        %v1054 = vrot.slane %v1053, 1
        %v1055 = vadd.f32 %v1053, %v1054
        %v1056 = vsel %vm899, %v1005, 0.0
        %v1057 = vsel %vm899, %v1007, 0.0
        %v1058 = vadd.f32 %v1056, %v1057
        %v1059 = vrot.slane %v1058, 4
        %v1060 = vadd.f32 %v1058, %v1059
        %v1061 = vrot.slane %v1060, 2
        %v1062 = vadd.f32 %v1060, %v1061
        %v1063 = vrot.slane %v1062, 1
        %v1064 = vadd.f32 %v1062, %v1063
        %v1065 = vsel %vm899, %v1009, 0.0
        %v1066 = vsel %vm899, %v1011, 0.0
        %v1067 = vadd.f32 %v1065, %v1066
        %v1068 = vrot.slane %v1067, 4
        %v1069 = vadd.f32 %v1067, %v1068
        %v1070 = vrot.slane %v1069, 2
        %v1071 = vadd.f32 %v1069, %v1070
        %v1072 = vrot.slane %v1071, 1
        %v1073 = vadd.f32 %v1071, %v1072
        %v1074 = vsel %vm899, %v1013, 0.0
        %v1075 = vsel %vm899, %v1015, 0.0
        %v1076 = vadd.f32 %v1074, %v1075
        %v1077 = vrot.slane %v1076, 4
        %v1078 = vadd.f32 %v1076, %v1077
        %v1079 = vrot.slane %v1078, 2
        %v1080 = vadd.f32 %v1078, %v1079
        %v1081 = vrot.slane %v1080, 1
        %v1082 = vadd.f32 %v1080, %v1081
        %v1083 = vsel %vm899, %v1017, 0.0
        %v1084 = vsel %vm899, %v1019, 0.0
        %v1085 = vadd.f32 %v1083, %v1084
        %v1086 = vrot.slane %v1085, 4
        %v1087 = vadd.f32 %v1085, %v1086
        %v1088 = vrot.slane %v1087, 2
        %v1089 = vadd.f32 %v1087, %v1088
        %v1090 = vrot.slane %v1089, 1
        %v1091 = vadd.f32 %v1089, %v1090
        %v1092 = vrcp.pop %v1028
        %v1093 = vrcp.pop %v1037
        %v1094 = vrcp.pop %v1046
        %v1095 = vrcp.pop %v1055
        %v1096 = vrcp.pop %v1064
        %v1097 = vrcp.pop %v1073
        %v1098 = vrcp.pop %v1082
        %v1099 = vrcp.pop %v1091
        %v1100 = vmul.f32 %v989, %v1092
        %v1101 = vmul.f32 %v991, %v1092
        %v1102 = vmul.f32 %v993, %v1093
        %v1103 = vmul.f32 %v995, %v1093
        %v1104 = vmul.f32 %v997, %v1094
        %v1105 = vmul.f32 %v999, %v1094
        %v1106 = vmul.f32 %v1001, %v1095
        %v1107 = vmul.f32 %v1003, %v1095
        %v1108 = vmul.f32 %v1005, %v1096
        %v1109 = vmul.f32 %v1007, %v1096
        %v1110 = vmul.f32 %v1009, %v1097
        %v1111 = vmul.f32 %v1011, %v1097
        %v1112 = vmul.f32 %v1013, %v1098
        %v1113 = vmul.f32 %v1015, %v1098
        %v1114 = vmul.f32 %v1017, %v1099
        %v1115 = vmul.f32 %v1019, %v1099
        %v1116 = vunpack.c.l.bf16 %v366
        %v1117 = vunpack.c.l.bf16 %v367
        %v1118 = vunpack.c.l.bf16 %v368
        %v1119 = vunpack.c.l.bf16 %v369
        %v1120 = vunpack.c.l.bf16 %v370
        %v1121 = vunpack.c.l.bf16 %v371
        %v1122 = vunpack.c.l.bf16 %v372
        %v1123 = vunpack.c.l.bf16 %v373
        %v1124 = vunpack.c.l.bf16 %v374
        %v1125 = vunpack.c.l.bf16 %v375
        %v1126 = vunpack.c.l.bf16 %v376
        %v1127 = vunpack.c.l.bf16 %v377
        %v1128 = vunpack.c.l.bf16 %v378
        %v1129 = vunpack.c.l.bf16 %v379
        %v1130 = vunpack.c.l.bf16 %v380
        %v1131 = vunpack.c.l.bf16 %v381
        %1133 = vset.pattern.permute.xlu0 0
        %1134 = vperm.xlu0 %1133, %v1100
        %v1135 = vpop.permute.xlu0 %1134
        %1138 = vset.pattern.permute.xlu0 0
        %1139 = vperm.xlu0 %1138, %v1101
        %v1140 = vpop.permute.xlu0 %1139
        %1143 = vset.pattern.permute.xlu0 0
        %1144 = vperm.xlu0 %1143, %v1102
        %v1145 = vpop.permute.xlu0 %1144
        %1148 = vset.pattern.permute.xlu0 0
        %1149 = vperm.xlu0 %1148, %v1103
        %v1150 = vpop.permute.xlu0 %1149
        %1153 = vset.pattern.permute.xlu0 0
        %1154 = vperm.xlu0 %1153, %v1104
        %v1155 = vpop.permute.xlu0 %1154
        %1158 = vset.pattern.permute.xlu0 0
        %1159 = vperm.xlu0 %1158, %v1105
        %v1160 = vpop.permute.xlu0 %1159
        %1163 = vset.pattern.permute.xlu0 0
        %1164 = vperm.xlu0 %1163, %v1106
        %v1165 = vpop.permute.xlu0 %1164
        %1168 = vset.pattern.permute.xlu0 0
        %1169 = vperm.xlu0 %1168, %v1107
        %v1170 = vpop.permute.xlu0 %1169
        %1173 = vset.pattern.permute.xlu0 0
        %1174 = vperm.xlu0 %1173, %v1108
        %v1175 = vpop.permute.xlu0 %1174
        %1178 = vset.pattern.permute.xlu0 0
        %1179 = vperm.xlu0 %1178, %v1109
        %v1180 = vpop.permute.xlu0 %1179
        %1183 = vset.pattern.permute.xlu0 0
        %1184 = vperm.xlu0 %1183, %v1110
        %v1185 = vpop.permute.xlu0 %1184
        %1188 = vset.pattern.permute.xlu0 0
        %1189 = vperm.xlu0 %1188, %v1111
        %v1190 = vpop.permute.xlu0 %1189
        %1193 = vset.pattern.permute.xlu0 0
        %1194 = vperm.xlu0 %1193, %v1112
        %v1195 = vpop.permute.xlu0 %1194
        %1198 = vset.pattern.permute.xlu0 0
        %1199 = vperm.xlu0 %1198, %v1113
        %v1200 = vpop.permute.xlu0 %1199
        %1203 = vset.pattern.permute.xlu0 0
        %1204 = vperm.xlu0 %1203, %v1114
        %v1205 = vpop.permute.xlu0 %1204
        %1208 = vset.pattern.permute.xlu0 0
        %1209 = vperm.xlu0 %1208, %v1115
        %v1210 = vpop.permute.xlu0 %1209
        %v1212 = vmul.f32 %v1135, %v1116
        %v1213 = vmul.f32 %v1140, %v1117
        %v1214 = vmul.f32 %v1145, %v1118
        %v1215 = vmul.f32 %v1150, %v1119
        %v1216 = vmul.f32 %v1155, %v1120
        %v1217 = vmul.f32 %v1160, %v1121
        %v1218 = vmul.f32 %v1165, %v1122
        %v1219 = vmul.f32 %v1170, %v1123
        %v1220 = vmul.f32 %v1175, %v1124
        %v1221 = vmul.f32 %v1180, %v1125
        %v1222 = vmul.f32 %v1185, %v1126
        %v1223 = vmul.f32 %v1190, %v1127
        %v1224 = vmul.f32 %v1195, %v1128
        %v1225 = vmul.f32 %v1200, %v1129
        %v1226 = vmul.f32 %v1205, %v1130
        %v1227 = vmul.f32 %v1210, %v1131
        %v1228 = vadd.f32 %v1212, %v1213
        %v1229 = vrot.slane %v1228, 4
        %v1230 = vadd.f32 %v1228, %v1229
        %v1231 = vrot.slane %v1230, 2
        %v1232 = vadd.f32 %v1230, %v1231
        %v1233 = vrot.slane %v1232, 1
        %v1234 = vadd.f32 %v1232, %v1233
        %v1235 = vadd.f32 %v1214, %v1215
        %v1236 = vrot.slane %v1235, 4
        %v1237 = vadd.f32 %v1235, %v1236
        %v1238 = vrot.slane %v1237, 2
        %v1239 = vadd.f32 %v1237, %v1238
        %v1240 = vrot.slane %v1239, 1
        %v1241 = vadd.f32 %v1239, %v1240
        %v1242 = vadd.f32 %v1216, %v1217
        %v1243 = vrot.slane %v1242, 4
        %v1244 = vadd.f32 %v1242, %v1243
        %v1245 = vrot.slane %v1244, 2
        %v1246 = vadd.f32 %v1244, %v1245
        %v1247 = vrot.slane %v1246, 1
        %v1248 = vadd.f32 %v1246, %v1247
        %v1249 = vadd.f32 %v1218, %v1219
        %v1250 = vrot.slane %v1249, 4
        %v1251 = vadd.f32 %v1249, %v1250
        %v1252 = vrot.slane %v1251, 2
        %v1253 = vadd.f32 %v1251, %v1252
        %v1254 = vrot.slane %v1253, 1
        %v1255 = vadd.f32 %v1253, %v1254
        %v1256 = vadd.f32 %v1220, %v1221
        %v1257 = vrot.slane %v1256, 4
        %v1258 = vadd.f32 %v1256, %v1257
        %v1259 = vrot.slane %v1258, 2
        %v1260 = vadd.f32 %v1258, %v1259
        %v1261 = vrot.slane %v1260, 1
        %v1262 = vadd.f32 %v1260, %v1261
        %v1263 = vadd.f32 %v1222, %v1223
        %v1264 = vrot.slane %v1263, 4
        %v1265 = vadd.f32 %v1263, %v1264
        %v1266 = vrot.slane %v1265, 2
        %v1267 = vadd.f32 %v1265, %v1266
        %v1268 = vrot.slane %v1267, 1
        %v1269 = vadd.f32 %v1267, %v1268
        %v1270 = vadd.f32 %v1224, %v1225
        %v1271 = vrot.slane %v1270, 4
        %v1272 = vadd.f32 %v1270, %v1271
        %v1273 = vrot.slane %v1272, 2
        %v1274 = vadd.f32 %v1272, %v1273
        %v1275 = vrot.slane %v1274, 1
        %v1276 = vadd.f32 %v1274, %v1275
        %v1277 = vadd.f32 %v1226, %v1227
        %v1278 = vrot.slane %v1277, 4
        %v1279 = vadd.f32 %v1277, %v1278
        %v1280 = vrot.slane %v1279, 2
        %v1281 = vadd.f32 %v1279, %v1280
        %v1282 = vrot.slane %v1281, 1
        %v1283 = vadd.f32 %v1281, %v1282
        %v1285 = vrot.slane %v382, 1
        %v1286 = vrot.slane %v382, 2
        %v1287 = vrot.slane %v382, 3
        %v1288 = vrot.slane %v382, 4
        %v1289 = vrot.slane %v382, 5
        %v1290 = vrot.slane %v382, 6
        %v1291 = vrot.slane %v382, 7
        %v1300 = vadd.f32 %v1234, %v382
        %v1301 = vadd.f32 %v1241, %v1285
        %v1302 = vadd.f32 %v1248, %v1286
        %v1303 = vadd.f32 %v1255, %v1287
        %v1304 = vadd.f32 %v1262, %v1288
        %v1305 = vadd.f32 %v1269, %v1289
        %v1306 = vadd.f32 %v1276, %v1290
        %v1307 = vadd.f32 %v1283, %v1291
        %v1316 = vrot.slane %v1301, 7
        %vm1317 = vcmask 1041409
        %v1318 = vsel %vm1317, %v1316, %v1300
        %v1319 = vrot.slane %v1302, 6
        %vm1320 = vcmask 1042434
        %v1321 = vsel %vm1320, %v1319, %v1318
        %v1322 = vrot.slane %v1303, 5
        %vm1323 = vcmask 1043459
        %v1324 = vsel %vm1323, %v1322, %v1321
        %v1325 = vrot.slane %v1304, 4
        %vm1326 = vcmask 1044484
        %v1327 = vsel %vm1326, %v1325, %v1324
        %v1328 = vrot.slane %v1305, 3
        %vm1329 = vcmask 1045509
        %v1330 = vsel %vm1329, %v1328, %v1327
        %v1331 = vrot.slane %v1306, 2
        %vm1332 = vcmask 1046534
        %v1333 = vsel %vm1332, %v1331, %v1330
        %v1334 = vrot.slane %v1307, 1
        %vm1335 = vcmask 1047559
        %v1336 = vsel %vm1335, %v1334, %v1333
        %1338 = vst [vmem:[%s363] sm:$0xff] %v1336
        %s1339 = sand.u32 %s193, 1
        %s1340 = scalar_lea.sflag [#allocation4], %s1339
        %s1341 = sand.u32 %s193, 1
        %s1342 = smul.addr %s1341, 8
        %s1343 = scalar_lea.vmem [#allocation10], %s1342
        // Predicated region
        $region65: #{tpu_custom_call.1} parent=47 // pred_check
          %p1344 = pneg %p203
        $region66: #{tpu_custom_call.1} parent=47 // pred_check_branch
          %1346 = sbr.rel (%p1344) target = $region68
        $region67: #{tpu_custom_call.1} parent=47 // pred_region
          %s1348 = ssub.s32 128, 128
          %1349 = vsyncadd %s1340, %s1348
          %s1350 = smul.addr %s28, 128
          %s1351 = scalar_lea.hbm %s7, %s1350
          %s1353 = sshll.u32 %s1343, 4
          %s1354 = int_to_ptr.vmem [resolvable:$true] %s1353
          %1356 = dma.vmem_to_hbm [thread:$0]  %s1354, 128, %s1351, %s1340
        $region68: #{tpu_custom_call.1} parent=47 // pred_fallthru
          _
      $region48: #{tpu_custom_call.1} parent=5 // pred_fallthru
        _
      %p1357 = scmp.le.s32.totalorder 2, %s23
      // Predicated region
      $region69: #{tpu_custom_call.1} parent=5 // pred_check
        %p1358 = pneg %p1357
      $region70: #{tpu_custom_call.1} parent=5 // pred_check_branch
        %1360 = sbr.rel (%p1358) target = $region72
      $region71: #{tpu_custom_call.1} parent=5 // pred_region
        %s1361 = ssub.s32 %s23, 2
        // Predicated region
        $region73: #{tpu_custom_call.1} parent=71 // pred_check
          %p1362 = pneg %p209
        $region74: #{tpu_custom_call.1} parent=71 // pred_check_branch
          %1364 = sbr.rel (%p1362) target = $region76
        $region75: #{tpu_custom_call.1} parent=71 // pred_region
          %s1365 = sand.u32 %s194, 1
          %s1366 = scalar_lea.sflag [#allocation4], %s1365
          %s1367 = sand.u32 %s194, 1
          %s1368 = smul.addr %s1367, 8
          %s1369 = scalar_lea.vmem [#allocation10], %s1368
          %1370 = dma.done %s1366, 128
        $region76: #{tpu_custom_call.1} parent=71 // pred_fallthru
          _
      $region72: #{tpu_custom_call.1} parent=5 // pred_fallthru
        _
    $region6: #{tpu_custom_call.1} parent=1 // loop_footer
      %s27 = sadd.s32 1, %s23
    $region7: #{tpu_custom_call.1} parent=1 // loop_footer_branch
      %22 = sbr.rel target = $region3
    $region8: #{tpu_custom_call.1} parent=1 // loop_exit
      _
    %1371 = vsyncpa [#allocation3], 1
    %s1372 = scalar_lea.sflag [#allocation3], 1
    %1373 = vsyncpa %s1372, 1
    %1374 = vsyncpa [#allocation6], 1
    %s1375 = scalar_lea.sflag [#allocation6], 1
    %1376 = vsyncpa %s1375, 1
    %1377 = vsyncpa [#allocation9], 1
    %1378 = vsyncpa [#allocation4], 1
    %s1379 = scalar_lea.sflag [#allocation4], 1
    %1380 = vsyncpa %s1379, 1

// kernel: tpu_custom_call.1
$region0: #{tpu_custom_call.1}
  #allocation0 [shape = 'u32[]', space=smem, size = 0x4, offset = 0x4, fixed_abs, tag = 'smem constant byte address 0x4 - core index']
  #allocation1 [shape = 'u32[144,128]{1,0:T(1,128)}', space=vmem, size = 0x12000, scoped, tag = 'internal scratch']
  %s0 = inlined_call_operand.hbm [shape: bf16[32,16,128], index: 0, kind: input, shape index: {}]
  %s1 = inlined_call_operand.hbm [shape: f32[32,128], index: 1, kind: input, shape index: {}]
  %s2 = inlined_call_operand.hbm [shape: bf16[128,128], index: 2, kind: input, shape index: {}]
  %s3 = inlined_call_operand.hbm [shape: bf16[128,128], index: 3, kind: input, shape index: {}]
  %s4 = inlined_call_operand.vmem [shape: f32[1,128], index: 4, kind: input, shape index: {}]
  %s5 = inlined_call_operand.vmem [shape: f32[1,128], index: 5, kind: input, shape index: {}]
  %s6 = inlined_call_operand.vmem [shape: f32[1,16,1], index: 6, kind: input, shape index: {}]
  %s7 = inlined_call_operand.hbm [shape: f32[32,128], index: 7, kind: output, shape index: {}]
  %s8 = sld [smem:[#allocation0]]
  $region77: #{tpu_custom_call.1} parent=0
    _
  %s10 = ssub.s32 1, %s8
  %s11 = scalar_select 0, %s10, %s8
  $region1: #{tpu_custom_call.1} parent=0
    #allocation2 [shape = 'u8[65536]{0}', space=vmem, size = 0x10000, scoped, tag = 'input window, operand 0']
    #allocation3 [shape = 's32[2]{0}', space=sflag, size = 0x8, scoped, tag = 'scoped memory for tpu_custom_call.1']
    #allocation4 [shape = 's32[2]{0}', space=sflag, size = 0x8, scoped, tag = 'scoped memory for tpu_custom_call.1']
    #allocation5 [shape = 'u8[8192]{0}', space=vmem, size = 0x2000, scoped, tag = 'input window, operand 1']
    #allocation6 [shape = 's32[2]{0}', space=sflag, size = 0x8, scoped, tag = 'scoped memory for tpu_custom_call.1']
    #allocation7 [shape = 'u8[32768]{0}', space=vmem, size = 0x8000, scoped, tag = 'input window, operand 2, single buffered']
    #allocation8 [shape = 'u8[32768]{0}', space=vmem, size = 0x8000, scoped, tag = 'input window, operand 3, single buffered']
    #allocation9 [shape = 's32[1]{0}', space=sflag, size = 0x4, scoped, tag = 'scoped memory for tpu_custom_call.1']
    #allocation10 [shape = 'u8[8192]{0}', space=vmem, size = 0x2000, scoped, tag = 'output window, operand 0']
    %12 = vsyncpa [#allocation3], 0
    %s13 = scalar_lea.sflag [#allocation3], 1
    %14 = vsyncpa %s13, 0
    %15 = vsyncpa [#allocation6], 0
    %s16 = scalar_lea.sflag [#allocation6], 1
    %17 = vsyncpa %s16, 0
    %18 = vsyncpa [#allocation9], 0
    %19 = vsyncpa [#allocation4], 0
    %s20 = scalar_lea.sflag [#allocation4], 1
    %21 = vsyncpa %s20, 0
    loop: start=0, step=1, limit=6
    $region2: #{tpu_custom_call.1} parent=1 // loop_pre_header
      _
    $region3: #{tpu_custom_call.1} parent=1 // loop_header
      %s23 = sphi 0, %s27
      %p24 = scmp.ge.s32.totalorder %s23, 6
      %s33 = sphi 0, %s35
      %s36 = sphi 0, %s33
      %s37 = sphi 0, %s36
      %s53 = sphi 0, %s37
      %s59 = sphi 0, %s61
      %s62 = sphi 0, %s59
      %s63 = sphi 0, %s62
      %s79 = sphi 0, %s63
      %s83 = sphi 0, %s83
      %s85 = sphi 0, %s83
      %s86 = sphi 0, %s85
      %s100 = sphi 0, %s86
      %s104 = sphi 0, %s104
      %s106 = sphi 0, %s104
      %s107 = sphi 0, %s106
      %s121 = sphi 0, %s107
      %s125 = sphi 0, %s125
      %s127 = sphi 0, %s125
      %s128 = sphi 0, %s127
      %s142 = sphi 0, %s128
      %s146 = sphi 0, %s146
      %s148 = sphi 0, %s146
      %s149 = sphi 0, %s148
      %s163 = sphi 0, %s149
      %s167 = sphi 0, %s167
      %s169 = sphi 0, %s167
      %s170 = sphi 0, %s169
      %s184 = sphi 0, %s170
      %s190 = sphi 0, %s192
      %s193 = sphi 0, %s190
      %s194 = sphi 0, %s193
      %s210 = sphi 0, %s194
    $region4: #{tpu_custom_call.1} parent=1 // loop_header_branch
      %26 = sbr.rel (%p24) target = $region8
    $region5: #{tpu_custom_call.1} parent=1 // loop_body
      %s28 = ssub.s32 %s23, 1
      %s29 = ssub.s32 %s23, 2
      %s30 = sadd.s32 %s23, 1
      %s31 = ssub.s32 %s23, %s30
      %p32 = scmp.eq.s32.totalorder %s31, 0
      %s34 = sadd.s32 %s33, 1
      %s35 = scalar_select %p32, %s33, %s34
      %p38 = pneg %p32
      %p39 = scmp.eq.s32.totalorder %s23, 3
      %p40 = por %p38, %p39
      %p41 = scmp.ne.s32.totalorder %s33, %s36
      %p42 = scmp.eq.s32.totalorder %s23, 0
      %p43 = por %p41, %p42
      %p44 = scmp.ne.s32.totalorder %s33, %s36
      %p45 = scmp.eq.s32.totalorder %s28, 3
      %p46 = por %p44, %p45
      %p47 = scmp.ne.s32.totalorder %s36, %s37
      %p48 = scmp.eq.s32.totalorder %s28, 0
      %p49 = por %p47, %p48
      %p50 = scmp.ne.s32.totalorder %s36, %s37
      %p51 = scmp.eq.s32.totalorder %s29, 3
      %p52 = por %p50, %p51
      %p54 = scmp.ne.s32.totalorder %s37, %s53
      %p55 = scmp.eq.s32.totalorder %s29, 0
      %p56 = por %p54, %p55
      %s57 = ssub.s32 %s23, %s30
      %p58 = scmp.eq.s32.totalorder %s57, 0
      %s60 = sadd.s32 %s59, 1
      %s61 = scalar_select %p58, %s59, %s60
      %p64 = pneg %p58
      %p65 = scmp.eq.s32.totalorder %s23, 3
      %p66 = por %p64, %p65
      %p67 = scmp.ne.s32.totalorder %s59, %s62
      %p68 = scmp.eq.s32.totalorder %s23, 0
      %p69 = por %p67, %p68
      %p70 = scmp.ne.s32.totalorder %s59, %s62
      %p71 = scmp.eq.s32.totalorder %s28, 3
      %p72 = por %p70, %p71
      %p73 = scmp.ne.s32.totalorder %s62, %s63
      %p74 = scmp.eq.s32.totalorder %s28, 0
      %p75 = por %p73, %p74
      %p76 = scmp.ne.s32.totalorder %s62, %s63
      %p77 = scmp.eq.s32.totalorder %s29, 3
      %p78 = por %p76, %p77
      %p80 = scmp.ne.s32.totalorder %s63, %s79
      %p81 = scmp.eq.s32.totalorder %s29, 0
      %p82 = por %p80, %p81
      %s84 = sadd.s32 %s83, 1
      %p87 = scmp.eq.s32.totalorder %s23, 3
      %p88 = scmp.ne.s32.totalorder %s83, %s85
      %p89 = scmp.eq.s32.totalorder %s23, 0
      %p90 = por %p88, %p89
      %p91 = scmp.ne.s32.totalorder %s83, %s85
      %p92 = scmp.eq.s32.totalorder %s28, 3
      %p93 = por %p91, %p92
      %p94 = scmp.ne.s32.totalorder %s85, %s86
      %p95 = scmp.eq.s32.totalorder %s28, 0
      %p96 = por %p94, %p95
      %p97 = scmp.ne.s32.totalorder %s85, %s86
      %p98 = scmp.eq.s32.totalorder %s29, 3
      %p99 = por %p97, %p98
      %p101 = scmp.ne.s32.totalorder %s86, %s100
      %p102 = scmp.eq.s32.totalorder %s29, 0
      %p103 = por %p101, %p102
      %s105 = sadd.s32 %s104, 1
      %p108 = scmp.eq.s32.totalorder %s23, 3
      %p109 = scmp.ne.s32.totalorder %s104, %s106
      %p110 = scmp.eq.s32.totalorder %s23, 0
      %p111 = por %p109, %p110
      %p112 = scmp.ne.s32.totalorder %s104, %s106
      %p113 = scmp.eq.s32.totalorder %s28, 3
      %p114 = por %p112, %p113
      %p115 = scmp.ne.s32.totalorder %s106, %s107
      %p116 = scmp.eq.s32.totalorder %s28, 0
      %p117 = por %p115, %p116
      %p118 = scmp.ne.s32.totalorder %s106, %s107
      %p119 = scmp.eq.s32.totalorder %s29, 3
      %p120 = por %p118, %p119
      %p122 = scmp.ne.s32.totalorder %s107, %s121
      %p123 = scmp.eq.s32.totalorder %s29, 0
      %p124 = por %p122, %p123
      %s126 = sadd.s32 %s125, 1
      %p129 = scmp.eq.s32.totalorder %s23, 3
      %p130 = scmp.ne.s32.totalorder %s125, %s127
      %p131 = scmp.eq.s32.totalorder %s23, 0
      %p132 = por %p130, %p131
      %p133 = scmp.ne.s32.totalorder %s125, %s127
      %p134 = scmp.eq.s32.totalorder %s28, 3
      %p135 = por %p133, %p134
      %p136 = scmp.ne.s32.totalorder %s127, %s128
      %p137 = scmp.eq.s32.totalorder %s28, 0
      %p138 = por %p136, %p137
      %p139 = scmp.ne.s32.totalorder %s127, %s128
      %p140 = scmp.eq.s32.totalorder %s29, 3
      %p141 = por %p139, %p140
      %p143 = scmp.ne.s32.totalorder %s128, %s142
      %p144 = scmp.eq.s32.totalorder %s29, 0
      %p145 = por %p143, %p144
      %s147 = sadd.s32 %s146, 1
      %p150 = scmp.eq.s32.totalorder %s23, 3
      %p151 = scmp.ne.s32.totalorder %s146, %s148
      %p152 = scmp.eq.s32.totalorder %s23, 0
      %p153 = por %p151, %p152
      %p154 = scmp.ne.s32.totalorder %s146, %s148
      %p155 = scmp.eq.s32.totalorder %s28, 3
      %p156 = por %p154, %p155
      %p157 = scmp.ne.s32.totalorder %s148, %s149
      %p158 = scmp.eq.s32.totalorder %s28, 0
      %p159 = por %p157, %p158
      %p160 = scmp.ne.s32.totalorder %s148, %s149
      %p161 = scmp.eq.s32.totalorder %s29, 3
      %p162 = por %p160, %p161
      %p164 = scmp.ne.s32.totalorder %s149, %s163
      %p165 = scmp.eq.s32.totalorder %s29, 0
      %p166 = por %p164, %p165
      %s168 = sadd.s32 %s167, 1
      %p171 = scmp.eq.s32.totalorder %s23, 3
      %p172 = scmp.ne.s32.totalorder %s167, %s169
      %p173 = scmp.eq.s32.totalorder %s23, 0
      %p174 = por %p172, %p173
      %p175 = scmp.ne.s32.totalorder %s167, %s169
      %p176 = scmp.eq.s32.totalorder %s28, 3
      %p177 = por %p175, %p176
      %p178 = scmp.ne.s32.totalorder %s169, %s170
      %p179 = scmp.eq.s32.totalorder %s28, 0
      %p180 = por %p178, %p179
      %p181 = scmp.ne.s32.totalorder %s169, %s170
      %p182 = scmp.eq.s32.totalorder %s29, 3
      %p183 = por %p181, %p182
      %p185 = scmp.ne.s32.totalorder %s170, %s184
      %p186 = scmp.eq.s32.totalorder %s29, 0
      %p187 = por %p185, %p186
      %s188 = ssub.s32 %s23, %s30
      %p189 = scmp.eq.s32.totalorder %s188, 0
      %s191 = sadd.s32 %s190, 1
      %s192 = scalar_select %p189, %s190, %s191
      %p195 = pneg %p189
      %p196 = scmp.eq.s32.totalorder %s23, 3
      %p197 = por %p195, %p196
      %p198 = scmp.ne.s32.totalorder %s190, %s193
      %p199 = scmp.eq.s32.totalorder %s23, 0
      %p200 = por %p198, %p199
      %p201 = scmp.ne.s32.totalorder %s190, %s193
      %p202 = scmp.eq.s32.totalorder %s28, 3
      %p203 = por %p201, %p202
      %p204 = scmp.ne.s32.totalorder %s193, %s194
      %p205 = scmp.eq.s32.totalorder %s28, 0
      %p206 = por %p204, %p205
      %p207 = scmp.ne.s32.totalorder %s193, %s194
      %p208 = scmp.eq.s32.totalorder %s29, 3
      %p209 = por %p207, %p208
      %p211 = scmp.ne.s32.totalorder %s194, %s210
      %p212 = scmp.eq.s32.totalorder %s29, 0
      %p213 = por %p211, %p212
      %p214 = scmp.le.s32.totalorder 1, %s23
      %p215 = scmp.lt.s32.totalorder %s23, 5
      %p216 = pnand %p214, %p215
      %p217 = pneg %p216
      // Predicated region
      $region9: #{tpu_custom_call.1} parent=5 // pred_check
        _
      $region10: #{tpu_custom_call.1} parent=5 // pred_check_branch
        %219 = sbr.rel (%p216) target = $region12
      $region11: #{tpu_custom_call.1} parent=5 // pred_region
        %s220 = ssub.s32 %s23, 1
        // Predicated region
        $region13: #{tpu_custom_call.1} parent=11 // pred_check
          %p221 = pneg %p96
        $region14: #{tpu_custom_call.1} parent=11 // pred_check_branch
          %223 = sbr.rel (%p221) target = $region16
        $region15: #{tpu_custom_call.1} parent=11 // pred_region
          %s225 = ssub.s32 1024, 1024
          %226 = vsyncadd [#allocation6], %s225
          %s227 = sshll.u32 [#allocation7], 4
          %s228 = int_to_ptr.vmem [resolvable:$true] %s227
          %233 = dma.hbm_to_vmem [thread:$0]  %s2, 1024, %s228, [#allocation6], 64, 64, 4
        $region16: #{tpu_custom_call.1} parent=11 // pred_fallthru
          _
        // Predicated region
        $region17: #{tpu_custom_call.1} parent=11 // pred_check
          %p234 = pneg %p117
        $region18: #{tpu_custom_call.1} parent=11 // pred_check_branch
          %236 = sbr.rel (%p234) target = $region20
        $region19: #{tpu_custom_call.1} parent=11 // pred_region
          %s238 = ssub.s32 1024, 1024
          %239 = vsyncadd [#allocation9], %s238
          %s240 = sshll.u32 [#allocation8], 4
          %s241 = int_to_ptr.vmem [resolvable:$true] %s240
          %246 = dma.hbm_to_vmem [thread:$0]  %s3, 1024, %s241, [#allocation9], 64, 64, 4
        $region20: #{tpu_custom_call.1} parent=11 // pred_fallthru
          _
        // Predicated region
        $region21: #{tpu_custom_call.1} parent=11 // pred_check
          %p247 = pneg %p138
        $region22: #{tpu_custom_call.1} parent=11 // pred_check_branch
          %249 = sbr.rel (%p247) target = $region24
        $region23: #{tpu_custom_call.1} parent=11 // pred_region
          _
        $region24: #{tpu_custom_call.1} parent=11 // pred_fallthru
          _
        // Predicated region
        $region25: #{tpu_custom_call.1} parent=11 // pred_check
          %p250 = pneg %p159
        $region26: #{tpu_custom_call.1} parent=11 // pred_check_branch
          %252 = sbr.rel (%p250) target = $region28
        $region27: #{tpu_custom_call.1} parent=11 // pred_region
          _
        $region28: #{tpu_custom_call.1} parent=11 // pred_fallthru
          _
        // Predicated region
        $region29: #{tpu_custom_call.1} parent=11 // pred_check
          %p253 = pneg %p180
        $region30: #{tpu_custom_call.1} parent=11 // pred_check_branch
          %255 = sbr.rel (%p253) target = $region32
        $region31: #{tpu_custom_call.1} parent=11 // pred_region
          _
        $region32: #{tpu_custom_call.1} parent=11 // pred_fallthru
          _
      $region12: #{tpu_custom_call.1} parent=5 // pred_fallthru
        _
      %p256 = scmp.lt.s32.totalorder %s23, 4
      // Predicated region
      $region33: #{tpu_custom_call.1} parent=5 // pred_check
        %p257 = pneg %p256
      $region34: #{tpu_custom_call.1} parent=5 // pred_check_branch
        %259 = sbr.rel (%p257) target = $region36
      $region35: #{tpu_custom_call.1} parent=5 // pred_region
        // Predicated region
        $region37: #{tpu_custom_call.1} parent=35 // pred_check
          %p260 = pneg %p43
        $region38: #{tpu_custom_call.1} parent=35 // pred_check_branch
          %262 = sbr.rel (%p260) target = $region40
        $region39: #{tpu_custom_call.1} parent=35 // pred_region
          %s263 = sand.u32 %s33, 1
          %s264 = scalar_lea.sflag [#allocation3], %s263
          %s265 = sand.u32 %s33, 1
          %s266 = smul.addr %s265, 64
          %s267 = scalar_lea.vmem [#allocation2], %s266
          %s268 = smul.u32 8, %s23
          %s270 = ssub.s32 1024, 1024
          %271 = vsyncadd %s264, %s270
          %s272 = smul.addr %s268, 2
          %s273 = smul.addr %s272, 64
          %s274 = scalar_lea.hbm %s0, %s273
          %s275 = sshll.u32 %s267, 4
          %s276 = int_to_ptr.vmem [resolvable:$true] %s275
          %281 = dma.hbm_to_vmem [thread:$0]  %s274, 1024, %s276, %s264, 64, 64, 4
        $region40: #{tpu_custom_call.1} parent=35 // pred_fallthru
          _
        // Predicated region
        $region41: #{tpu_custom_call.1} parent=35 // pred_check
          %p282 = pneg %p69
        $region42: #{tpu_custom_call.1} parent=35 // pred_check_branch
          %284 = sbr.rel (%p282) target = $region44
        $region43: #{tpu_custom_call.1} parent=35 // pred_region
          %s285 = sand.u32 %s23, 1
          %s286 = scalar_lea.sflag [#allocation6], %s285
          %s287 = sand.u32 %s59, 1
          %s288 = smul.addr %s287, 8
          %s289 = scalar_lea.vmem [#allocation5], %s288
          %s291 = ssub.s32 128, 128
          %292 = vsyncadd %s286, %s291
          %s293 = smul.addr %s23, 128
          %s294 = scalar_lea.hbm %s1, %s293
          %s296 = sshll.u32 %s289, 4
          %s297 = int_to_ptr.vmem [resolvable:$true] %s296
          %299 = dma.hbm_to_vmem [thread:$0]  %s294, 128, %s297, %s286
        $region44: #{tpu_custom_call.1} parent=35 // pred_fallthru
          _
      $region36: #{tpu_custom_call.1} parent=5 // pred_fallthru
        _
      %p300 = scmp.le.s32.totalorder 1, %s23
      %p301 = scmp.lt.s32.totalorder %s23, 5
      %p302 = pnand %p300, %p301
      %p303 = pneg %p302
      // Predicated region
      $region45: #{tpu_custom_call.1} parent=5 // pred_check
        _
      $region46: #{tpu_custom_call.1} parent=5 // pred_check_branch
        %305 = sbr.rel (%p302) target = $region48
      $region47: #{tpu_custom_call.1} parent=5 // pred_region
        %s306 = ssub.s32 %s23, 1
        %s307 = sand.u32 %s36, 1
        %s308 = scalar_lea.sflag [#allocation3], %s307
        %s309 = sand.u32 %s36, 1
        %s310 = smul.addr %s309, 64
        %s311 = scalar_lea.vmem [#allocation2], %s310
        // Predicated region
        $region49: #{tpu_custom_call.1} parent=47 // pred_check
          %p312 = pneg %p49
        $region50: #{tpu_custom_call.1} parent=47 // pred_check_branch
          %314 = sbr.rel (%p312) target = $region52
        $region51: #{tpu_custom_call.1} parent=47 // pred_region
          %315 = dma.done %s308, 1024
        $region52: #{tpu_custom_call.1} parent=47 // pred_fallthru
          _
        %s316 = sand.u32 %s28, 1
        %s317 = scalar_lea.sflag [#allocation6], %s316
        %s318 = sand.u32 %s62, 1
        %s319 = smul.addr %s318, 8
        %s320 = scalar_lea.vmem [#allocation5], %s319
        // Predicated region
        $region53: #{tpu_custom_call.1} parent=47 // pred_check
          %p321 = pneg %p75
        $region54: #{tpu_custom_call.1} parent=47 // pred_check_branch
          %323 = sbr.rel (%p321) target = $region56
        $region55: #{tpu_custom_call.1} parent=47 // pred_region
          %324 = dma.done %s317, 128
        $region56: #{tpu_custom_call.1} parent=47 // pred_fallthru
          _
        // Predicated region
        $region57: #{tpu_custom_call.1} parent=47 // pred_check
          %p325 = pneg %p96
        $region58: #{tpu_custom_call.1} parent=47 // pred_check_branch
          %327 = sbr.rel (%p325) target = $region60
        $region59: #{tpu_custom_call.1} parent=47 // pred_region
          %328 = dma.done [#allocation6], 1024
        $region60: #{tpu_custom_call.1} parent=47 // pred_fallthru
          _
        // Predicated region
        $region61: #{tpu_custom_call.1} parent=47 // pred_check
          %p329 = pneg %p117
        $region62: #{tpu_custom_call.1} parent=47 // pred_check_branch
          %331 = sbr.rel (%p329) target = $region64
        $region63: #{tpu_custom_call.1} parent=47 // pred_region
          %332 = dma.done [#allocation9], 1024
        $region64: #{tpu_custom_call.1} parent=47 // pred_fallthru
          _
        %s333 = sand.u32 %s36, 1
        %s334 = scalar_lea.sflag [#allocation3], %s333
        %s335 = sand.u32 %s36, 1
        %s336 = smul.addr %s335, 64
        %s337 = scalar_lea.vmem [#allocation2], %s336
        %p338 = pneg %p49
        %p339 = pneg %p46
        %s340 = sand.u32 %s28, 1
        %s341 = scalar_lea.sflag [#allocation6], %s340
        %s342 = sand.u32 %s62, 1
        %s343 = smul.addr %s342, 8
        %s344 = scalar_lea.vmem [#allocation5], %s343
        %p345 = pneg %p75
        %p346 = pneg %p72
        %p347 = pneg %p96
        %p348 = pneg %p93
        %p349 = pneg %p117
        %p350 = pneg %p114
        %p351 = pneg %p138
        %p352 = pneg %p135
        %p353 = pneg %p159
        %p354 = pneg %p156
        %p355 = pneg %p180
        %p356 = pneg %p177
        %p357 = pneg %p206
        %p358 = pneg %p203
        %s359 = sand.u32 %s193, 1
        %s360 = scalar_lea.sflag [#allocation4], %s359
        %s361 = sand.u32 %s193, 1
        %s362 = smul.addr %s361, 8
        %s363 = scalar_lea.vmem [#allocation10], %s362
        %s364 = smul.u32 8, %s28
        %v366 = vld [vmem:[%s311] sm:$0xf]
        %v367 = vld [vmem:[%s311 + $0x4] sm:$0xf]
        %v368 = vld [vmem:[%s311 + $0x8] sm:$0xf]
        %v369 = vld [vmem:[%s311 + $0xc] sm:$0xf]
        %v370 = vld [vmem:[%s311 + $0x10] sm:$0xf]
        %v371 = vld [vmem:[%s311 + $0x14] sm:$0xf]
        %v372 = vld [vmem:[%s311 + $0x18] sm:$0xf]
        %v373 = vld [vmem:[%s311 + $0x1c] sm:$0xf]
        %v374 = vld [vmem:[%s311 + $0x20] sm:$0xf]
        %v375 = vld [vmem:[%s311 + $0x24] sm:$0xf]
        %v376 = vld [vmem:[%s311 + $0x28] sm:$0xf]
        %v377 = vld [vmem:[%s311 + $0x2c] sm:$0xf]
        %v378 = vld [vmem:[%s311 + $0x30] sm:$0xf]
        %v379 = vld [vmem:[%s311 + $0x34] sm:$0xf]
        %v380 = vld [vmem:[%s311 + $0x38] sm:$0xf]
        %v381 = vld [vmem:[%s311 + $0x3c] sm:$0xf]
        %v382 = vld [vmem:[%s320] sm:$0xff]
        %v383 = vld [vmem:[#allocation7] sm:$0xf]
        %v384 = vld [vmem:[#allocation7 + $0x4] sm:$0xf]
        %v385 = vld [vmem:[#allocation7 + $0x8] sm:$0xf]
        %v386 = vld [vmem:[#allocation7 + $0xc] sm:$0xf]
        %v387 = vld [vmem:[#allocation7 + $0x10] sm:$0xf]
        %v388 = vld [vmem:[#allocation7 + $0x14] sm:$0xf]
        %v389 = vld [vmem:[#allocation7 + $0x18] sm:$0xf]
        %v390 = vld [vmem:[#allocation7 + $0x1c] sm:$0xf]
        %v391 = vld [vmem:[#allocation7 + $0x20] sm:$0xf]
        %v392 = vld [vmem:[#allocation7 + $0x24] sm:$0xf]
        %v393 = vld [vmem:[#allocation7 + $0x28] sm:$0xf]
        %v394 = vld [vmem:[#allocation7 + $0x2c] sm:$0xf]
        %v395 = vld [vmem:[#allocation7 + $0x30] sm:$0xf]
        %v396 = vld [vmem:[#allocation7 + $0x34] sm:$0xf]
        %v397 = vld [vmem:[#allocation7 + $0x38] sm:$0xf]
        %v398 = vld [vmem:[#allocation7 + $0x3c] sm:$0xf]
        %v415 = vunpack.c.l.b16 %v366
        %v416 = vunpack.c.l.b16 %v367
        %v417 = vunpack.c.l.b16 %v368
        %v418 = vunpack.c.l.b16 %v369
        %v419 = vunpack.c.l.b16 %v370
        %v420 = vunpack.c.l.b16 %v371
        %v421 = vunpack.c.l.b16 %v372
        %v422 = vunpack.c.l.b16 %v373
        %v423 = vunpack.c.l.b16 %v374
        %v424 = vunpack.c.l.b16 %v375
        %v425 = vunpack.c.l.b16 %v376
        %v426 = vunpack.c.l.b16 %v377
        %v427 = vunpack.c.l.b16 %v378
        %v428 = vunpack.c.l.b16 %v379
        %v429 = vunpack.c.l.b16 %v380
        %v430 = vunpack.c.l.b16 %v381
        %v431 = vpack.c.b16 %v416, %v415
        %v432 = vpack.c.b16 %v418, %v417
        %v433 = vpack.c.b16 %v420, %v419
        %v434 = vpack.c.b16 %v422, %v421
        %v435 = vpack.c.b16 %v424, %v423
        %v436 = vpack.c.b16 %v426, %v425
        %v437 = vpack.c.b16 %v428, %v427
        %v438 = vpack.c.b16 %v430, %v429
        %v463 = vunpack.c.l.b16 %v383
        %v464 = vunpack.c.l.b16 %v384
        %v465 = vunpack.c.l.b16 %v385
        %v466 = vunpack.c.l.b16 %v386
        %v467 = vunpack.c.l.b16 %v387
        %v468 = vunpack.c.l.b16 %v388
        %v469 = vunpack.c.l.b16 %v389
        %v470 = vunpack.c.l.b16 %v390
        %v471 = vunpack.c.l.b16 %v391
        %v472 = vunpack.c.l.b16 %v392
        %v473 = vunpack.c.l.b16 %v393
        %v474 = vunpack.c.l.b16 %v394
        %v475 = vunpack.c.l.b16 %v395
        %v476 = vunpack.c.l.b16 %v396
        %v477 = vunpack.c.l.b16 %v397
        %v478 = vunpack.c.l.b16 %v398
        %v479 = vpack.c.b16 %v464, %v463
        %v480 = vpack.c.b16 %v466, %v465
        %v481 = vpack.c.b16 %v468, %v467
        %v482 = vpack.c.b16 %v470, %v469
        %v483 = vpack.c.b16 %v472, %v471
        %v484 = vpack.c.b16 %v474, %v473
        %v485 = vpack.c.b16 %v476, %v475
        %v486 = vpack.c.b16 %v478, %v477
        %495 = vmatprep.subr.bf16.mxu0 0
        %496 = vmatpush1.bf16.msra.mxu0 %v479
        %497 = vmatprep.subr.bf16.mxu0 0
        %498 = vmatpush1.bf16.msra.mxu0 %v480
        %499 = vmatprep.subr.bf16.mxu0 0
        %500 = vmatpush1.bf16.msra.mxu0 %v481
        %501 = vmatprep.subr.bf16.mxu0 0
        %502 = vmatpush1.bf16.msra.mxu0 %v482
        %503 = vmatprep.subr.bf16.mxu0 0
        %504 = vmatpush1.bf16.msra.mxu0 %v483
        %505 = vmatprep.subr.bf16.mxu0 0
        %506 = vmatpush1.bf16.msra.mxu0 %v484
        %507 = vmatprep.subr.bf16.mxu0 0
        %508 = vmatpush1.bf16.msra.mxu0 %v485
        %509 = vmatprep.subr.bf16.mxu0 0
        %510 = vmatpush1.bf16.msra.mxu0 %v486
        %511 = vmatprep.subr.bf16.mxu0 0
        %512 = vmatpush1.bf16.msra.mxu0 0
        %513 = vmatprep.subr.bf16.mxu0 0
        %514 = vmatpush1.bf16.msra.mxu0 0
        %515 = vmatprep.subr.bf16.mxu0 0
        %516 = vmatpush1.bf16.msra.mxu0 0
        %517 = vmatprep.subr.bf16.mxu0 0
        %518 = vmatpush1.bf16.msra.mxu0 0
        %519 = vmatprep.subr.bf16.mxu0 0
        %520 = vmatpush1.bf16.msra.mxu0 0
        %521 = vmatprep.subr.bf16.mxu0 0
        %522 = vmatpush1.bf16.msra.mxu0 0
        %523 = vmatprep.subr.bf16.mxu0 0
        %524 = vmatpush1.bf16.msra.mxu0 0
        %525 = vmatprep.subr.bf16.mxu0 0
        %526 = vmatpush1.bf16.msra.mxu0 0
        %527 = vmatprep.mubr.bf16.mxu0 0
        %528 = vmatmul.mubr.bf16.gmra.mrb[0].mxu0 %v431
        %v529 = vpop.f32.mrb[0].mxu0
        %v530 = vadd.f32 0.0, %v529
        %v531 = vpop.f32.mrb[0].mxu0
        %v532 = vpop.f32.mrb[0].mxu0
        %v533 = vadd.f32 0.0, %v532
        %v534 = vpop.f32.mrb[0].mxu0
        %535 = vmatprep.mubr.bf16.mxu0 0
        %536 = vmatmul.mubr.bf16.gmra.mrb[0].mxu0 %v432
        %v537 = vpop.f32.mrb[0].mxu0
        %v538 = vadd.f32 0.0, %v537
        %v539 = vpop.f32.mrb[0].mxu0
        %v540 = vpop.f32.mrb[0].mxu0
        %v541 = vadd.f32 0.0, %v540
        %v542 = vpop.f32.mrb[0].mxu0
        %543 = vmatprep.mubr.bf16.mxu0 0
        %544 = vmatmul.mubr.bf16.gmra.mrb[0].mxu0 %v433
        %v545 = vpop.f32.mrb[0].mxu0
        %v546 = vadd.f32 0.0, %v545
        %v547 = vpop.f32.mrb[0].mxu0
        %v548 = vpop.f32.mrb[0].mxu0
        %v549 = vadd.f32 0.0, %v548
        %v550 = vpop.f32.mrb[0].mxu0
        %551 = vmatprep.mubr.bf16.mxu0 0
        %552 = vmatmul.mubr.bf16.gmra.mrb[0].mxu0 %v434
        %v553 = vpop.f32.mrb[0].mxu0
        %v554 = vadd.f32 0.0, %v553
        %v555 = vpop.f32.mrb[0].mxu0
        %v556 = vpop.f32.mrb[0].mxu0
        %v557 = vadd.f32 0.0, %v556
        %v558 = vpop.f32.mrb[0].mxu0
        %559 = vmatprep.mubr.bf16.mxu0 0
        %560 = vmatmul.mubr.bf16.gmra.mrb[0].mxu0 %v435
        %v561 = vpop.f32.mrb[0].mxu0
        %v562 = vadd.f32 0.0, %v561
        %v563 = vpop.f32.mrb[0].mxu0
        %v564 = vpop.f32.mrb[0].mxu0
        %v565 = vadd.f32 0.0, %v564
        %v566 = vpop.f32.mrb[0].mxu0
        %567 = vmatprep.mubr.bf16.mxu0 0
        %568 = vmatmul.mubr.bf16.gmra.mrb[0].mxu0 %v436
        %v569 = vpop.f32.mrb[0].mxu0
        %v570 = vadd.f32 0.0, %v569
        %v571 = vpop.f32.mrb[0].mxu0
        %v572 = vpop.f32.mrb[0].mxu0
        %v573 = vadd.f32 0.0, %v572
        %v574 = vpop.f32.mrb[0].mxu0
        %575 = vmatprep.mubr.bf16.mxu0 0
        %576 = vmatmul.mubr.bf16.gmra.mrb[0].mxu0 %v437
        %v577 = vpop.f32.mrb[0].mxu0
        %v578 = vadd.f32 0.0, %v577
        %v579 = vpop.f32.mrb[0].mxu0
        %v580 = vpop.f32.mrb[0].mxu0
        %v581 = vadd.f32 0.0, %v580
        %v582 = vpop.f32.mrb[0].mxu0
        %583 = vmatprep.mubr.bf16.mxu0 0
        %584 = vmatmul.mubr.bf16.gmra.mrb[0].mxu0 %v438
        %v585 = vpop.f32.mrb[0].mxu0
        %v586 = vadd.f32 0.0, %v585
        %v587 = vpop.f32.mrb[0].mxu0
        %v588 = vpop.f32.mrb[0].mxu0
        %v589 = vadd.f32 0.0, %v588
        %v590 = vpop.f32.mrb[0].mxu0
        %591 = vdwg.mxu0
        %v592 = vpack.c.bf16 %v382, %v382
        %v593 = vld [vmem:[#allocation8] sm:$0xf]
        %v594 = vld [vmem:[#allocation8 + $0x4] sm:$0xf]
        %v595 = vld [vmem:[#allocation8 + $0x8] sm:$0xf]
        %v596 = vld [vmem:[#allocation8 + $0xc] sm:$0xf]
        %v597 = vld [vmem:[#allocation8 + $0x10] sm:$0xf]
        %v598 = vld [vmem:[#allocation8 + $0x14] sm:$0xf]
        %v599 = vld [vmem:[#allocation8 + $0x18] sm:$0xf]
        %v600 = vld [vmem:[#allocation8 + $0x1c] sm:$0xf]
        %v601 = vld [vmem:[#allocation8 + $0x20] sm:$0xf]
        %v602 = vld [vmem:[#allocation8 + $0x24] sm:$0xf]
        %v603 = vld [vmem:[#allocation8 + $0x28] sm:$0xf]
        %v604 = vld [vmem:[#allocation8 + $0x2c] sm:$0xf]
        %v605 = vld [vmem:[#allocation8 + $0x30] sm:$0xf]
        %v606 = vld [vmem:[#allocation8 + $0x34] sm:$0xf]
        %v607 = vld [vmem:[#allocation8 + $0x38] sm:$0xf]
        %v608 = vld [vmem:[#allocation8 + $0x3c] sm:$0xf]
        %v609 = vld [vmem:[%s4] sm:$0x1]
        %v611 = vlaneseq
        %v612 = vshrl.u32 %v611, 7
        %v613 = vsub.s32 0, %v612
        %v614 = vrot.slane %v609, %v613
        %v632 = vunpack.c.l.b16 %v593
        %v633 = vunpack.c.l.b16 %v594
        %v634 = vunpack.c.l.b16 %v595
        %v635 = vunpack.c.l.b16 %v596
        %v636 = vunpack.c.l.b16 %v597
        %v637 = vunpack.c.l.b16 %v598
        %v638 = vunpack.c.l.b16 %v599
        %v639 = vunpack.c.l.b16 %v600
        %v640 = vunpack.c.l.b16 %v601
        %v641 = vunpack.c.l.b16 %v602
        %v642 = vunpack.c.l.b16 %v603
        %v643 = vunpack.c.l.b16 %v604
        %v644 = vunpack.c.l.b16 %v605
        %v645 = vunpack.c.l.b16 %v606
        %v646 = vunpack.c.l.b16 %v607
        %v647 = vunpack.c.l.b16 %v608
        %v648 = vpack.c.b16 %v633, %v632
        %v649 = vpack.c.b16 %v635, %v634
        %v650 = vpack.c.b16 %v637, %v636
        %v651 = vpack.c.b16 %v639, %v638
        %v652 = vpack.c.b16 %v641, %v640
        %v653 = vpack.c.b16 %v643, %v642
        %v654 = vpack.c.b16 %v645, %v644
        %v655 = vpack.c.b16 %v647, %v646
        %664 = vmatprep.subr.bf16.mxu0 0
        %665 = vmatpush1.bf16.msra.mxu0 %v648
        %666 = vmatprep.subr.bf16.mxu0 0
        %667 = vmatpush1.bf16.msra.mxu0 %v649
        %668 = vmatprep.subr.bf16.mxu0 0
        %669 = vmatpush1.bf16.msra.mxu0 %v650
        %670 = vmatprep.subr.bf16.mxu0 0
        %671 = vmatpush1.bf16.msra.mxu0 %v651
        %672 = vmatprep.subr.bf16.mxu0 0
        %673 = vmatpush1.bf16.msra.mxu0 %v652
        %674 = vmatprep.subr.bf16.mxu0 0
        %675 = vmatpush1.bf16.msra.mxu0 %v653
        %676 = vmatprep.subr.bf16.mxu0 0
        %677 = vmatpush1.bf16.msra.mxu0 %v654
        %678 = vmatprep.subr.bf16.mxu0 0
        %679 = vmatpush1.bf16.msra.mxu0 %v655
        %680 = vmatprep.subr.bf16.mxu0 0
        %681 = vmatpush1.bf16.msra.mxu0 0
        %682 = vmatprep.subr.bf16.mxu0 0
        %683 = vmatpush1.bf16.msra.mxu0 0
        %684 = vmatprep.subr.bf16.mxu0 0
        %685 = vmatpush1.bf16.msra.mxu0 0
        %686 = vmatprep.subr.bf16.mxu0 0
        %687 = vmatpush1.bf16.msra.mxu0 0
        %688 = vmatprep.subr.bf16.mxu0 0
        %689 = vmatpush1.bf16.msra.mxu0 0
        %690 = vmatprep.subr.bf16.mxu0 0
        %691 = vmatpush1.bf16.msra.mxu0 0
        %692 = vmatprep.subr.bf16.mxu0 0
        %693 = vmatpush1.bf16.msra.mxu0 0
        %694 = vmatprep.subr.bf16.mxu0 0
        %695 = vmatpush1.bf16.msra.mxu0 0
        %696 = vmatprep.mubr.bf16.mxu0 0
        %697 = vmatmul.mubr.bf16.gmra.mrb[0].mxu0 %v592
        %v698 = vpop.f32.mrb[0].mxu0
        %v699 = vadd.f32 %v614, %v698
        %v700 = vpop.f32.mrb[0].mxu0
        %v701 = vpop.f32.mrb[0].mxu0
        %v702 = vpop.f32.mrb[0].mxu0
        %703 = vdwg.mxu0
        %v705 = vcombine.high %v699, %v699
        %v707 = vunpack.c.l.s4 1966171168
        %v708 = vunpack.c.0.s8 %v707
        %v709 = vlaneseq
        %v710 = vshrl.u32 %v709, 7
        %v711 = vsub.s32 %v708, %v710
        %v712 = vrot.slane %v699, %v711
        %v714 = vunpack.c.l.s4 1966171168
        %v715 = vunpack.c.0.s8 %v714
        %v716 = vlaneseq
        %v717 = vshrl.u32 %v716, 7
        %v718 = vsub.s32 %v715, %v717
        %v719 = vrot.slane %v705, %v718
        %v720 = vcombine.high %v712, %v712
        %v721 = vcombine.high %v719, %v719
        %v723 = vunpack.c.l.s4 1966171168
        %v724 = vunpack.c.0.s8 %v723
        %v725 = vlaneseq
        %v726 = vshrl.u32 %v725, 7
        %v727 = vsub.s32 %v724, %v726
        %v728 = vrot.slane %v712, %v727
        %v730 = vunpack.c.l.s4 1966171168
        %v731 = vunpack.c.0.s8 %v730
        %v732 = vlaneseq
        %v733 = vshrl.u32 %v732, 7
        %v734 = vsub.s32 %v731, %v733
        %v735 = vrot.slane %v719, %v734
        %v737 = vunpack.c.l.s4 1966171168
        %v738 = vunpack.c.0.s8 %v737
        %v739 = vlaneseq
        %v740 = vshrl.u32 %v739, 7
        %v741 = vsub.s32 %v738, %v740
        %v742 = vrot.slane %v720, %v741
        %v744 = vunpack.c.l.s4 1966171168
        %v745 = vunpack.c.0.s8 %v744
        %v746 = vlaneseq
        %v747 = vshrl.u32 %v746, 7
        %v748 = vsub.s32 %v745, %v747
        %v749 = vrot.slane %v721, %v748
        %v750 = vcombine.high %v728, %v728
        %v751 = vcombine.high %v735, %v735
        %v752 = vcombine.high %v742, %v742
        %v753 = vcombine.high %v749, %v749
        %v754 = vlaneseq
        %v755 = vshrl.u32 %v754, 7
        %v756 = vsub.s32 0, %v755
        %v757 = vrot.slane %v728, %v756
        %v758 = vlaneseq
        %v759 = vshrl.u32 %v758, 7
        %v760 = vsub.s32 0, %v759
        %v761 = vrot.slane %v742, %v760
        %v762 = vlaneseq
        %v763 = vshrl.u32 %v762, 7
        %v764 = vsub.s32 0, %v763
        %v765 = vrot.slane %v750, %v764
        %v766 = vlaneseq
        %v767 = vshrl.u32 %v766, 7
        %v768 = vsub.s32 0, %v767
        %v769 = vrot.slane %v752, %v768
        %v770 = vlaneseq
        %v771 = vshrl.u32 %v770, 7
        %v772 = vsub.s32 0, %v771
        %v773 = vrot.slane %v735, %v772
        %v774 = vlaneseq
        %v775 = vshrl.u32 %v774, 7
        %v776 = vsub.s32 0, %v775
        %v777 = vrot.slane %v749, %v776
        %v778 = vlaneseq
        %v779 = vshrl.u32 %v778, 7
        %v780 = vsub.s32 0, %v779
        %v781 = vrot.slane %v751, %v780
        %v782 = vlaneseq
        %v783 = vshrl.u32 %v782, 7
        %v784 = vsub.s32 0, %v783
        %v785 = vrot.slane %v753, %v784
        %v794 = vadd.f32 %v757, %v530
        %v795 = vadd.f32 %v757, %v533
        %v796 = vadd.f32 %v761, %v538
        %v797 = vadd.f32 %v761, %v541
        %v798 = vadd.f32 %v765, %v546
        %v799 = vadd.f32 %v765, %v549
        %v800 = vadd.f32 %v769, %v554
        %v801 = vadd.f32 %v769, %v557
        %v802 = vadd.f32 %v773, %v562
        %v803 = vadd.f32 %v773, %v565
        %v804 = vadd.f32 %v777, %v570
        %v805 = vadd.f32 %v777, %v573
        %v806 = vadd.f32 %v781, %v578
        %v807 = vadd.f32 %v781, %v581
        %v808 = vadd.f32 %v785, %v586
        %v809 = vadd.f32 %v785, %v589
        %v810 = vtanh.pop %v794
        %v811 = vtanh.pop %v795
        %v812 = vtanh.pop %v796
        %v813 = vtanh.pop %v797
        %v814 = vtanh.pop %v798
        %v815 = vtanh.pop %v799
        %v816 = vtanh.pop %v800
        %v817 = vtanh.pop %v801
        %v818 = vtanh.pop %v802
        %v819 = vtanh.pop %v803
        %v820 = vtanh.pop %v804
        %v821 = vtanh.pop %v805
        %v822 = vtanh.pop %v806
        %v823 = vtanh.pop %v807
        %v824 = vtanh.pop %v808
        %v825 = vtanh.pop %v809
        %v826 = vld [vmem:[%s5] sm:$0x1]
        %v828 = vlaneseq
        %v829 = vshrl.u32 %v828, 7
        %v830 = vsub.s32 0, %v829
        %v831 = vrot.slane %v826, %v830
        %v833 = vmul.f32 %v810, %v831
        %v834 = vmul.f32 %v811, %v831
        %v835 = vmul.f32 %v812, %v831
        %v836 = vmul.f32 %v813, %v831
        %v837 = vmul.f32 %v814, %v831
        %v838 = vmul.f32 %v815, %v831
        %v839 = vmul.f32 %v816, %v831
        %v840 = vmul.f32 %v817, %v831
        %v841 = vmul.f32 %v818, %v831
        %v842 = vmul.f32 %v819, %v831
        %v843 = vmul.f32 %v820, %v831
        %v844 = vmul.f32 %v821, %v831
        %v845 = vmul.f32 %v822, %v831
        %v846 = vmul.f32 %v823, %v831
        %v847 = vmul.f32 %v824, %v831
        %v848 = vmul.f32 %v825, %v831
        %849 = vadd.xlane.f32.xlu0 %v833
        %v850 = vpop.xlane.xlu0 %849
        %851 = vadd.xlane.f32.xlu0 %v834
        %v852 = vpop.xlane.xlu0 %851
        %853 = vadd.xlane.f32.xlu0 %v835
        %v854 = vpop.xlane.xlu0 %853
        %855 = vadd.xlane.f32.xlu0 %v836
        %v856 = vpop.xlane.xlu0 %855
        %857 = vadd.xlane.f32.xlu0 %v837
        %v858 = vpop.xlane.xlu0 %857
        %859 = vadd.xlane.f32.xlu0 %v838
        %v860 = vpop.xlane.xlu0 %859
        %861 = vadd.xlane.f32.xlu0 %v839
        %v862 = vpop.xlane.xlu0 %861
        %863 = vadd.xlane.f32.xlu0 %v840
        %v864 = vpop.xlane.xlu0 %863
        %865 = vadd.xlane.f32.xlu0 %v841
        %v866 = vpop.xlane.xlu0 %865
        %867 = vadd.xlane.f32.xlu0 %v842
        %v868 = vpop.xlane.xlu0 %867
        %869 = vadd.xlane.f32.xlu0 %v843
        %v870 = vpop.xlane.xlu0 %869
        %871 = vadd.xlane.f32.xlu0 %v844
        %v872 = vpop.xlane.xlu0 %871
        %873 = vadd.xlane.f32.xlu0 %v845
        %v874 = vpop.xlane.xlu0 %873
        %875 = vadd.xlane.f32.xlu0 %v846
        %v876 = vpop.xlane.xlu0 %875
        %877 = vadd.xlane.f32.xlu0 %v847
        %v878 = vpop.xlane.xlu0 %877
        %879 = vadd.xlane.f32.xlu0 %v848
        %v880 = vpop.xlane.xlu0 %879
        %v881 = vld [vmem:[%s6] sm:$0xff]
        %v882 = vld [vmem:[%s6 + $0x8] sm:$0xff]
        %v883 = vadd.f32 %v850, %v881
        %v884 = vadd.f32 %v852, %v882
        %v885 = vadd.f32 %v854, %v881
        %v886 = vadd.f32 %v856, %v882
        %v887 = vadd.f32 %v858, %v881
        %v888 = vadd.f32 %v860, %v882
        %v889 = vadd.f32 %v862, %v881
        %v890 = vadd.f32 %v864, %v882
        %v891 = vadd.f32 %v866, %v881
        %v892 = vadd.f32 %v868, %v882
        %v893 = vadd.f32 %v870, %v881
        %v894 = vadd.f32 %v872, %v882
        %v895 = vadd.f32 %v874, %v881
        %v896 = vadd.f32 %v876, %v882
        %v897 = vadd.f32 %v878, %v881
        %v898 = vadd.f32 %v880, %v882
        %vm899 = vcmask 7168
        %v900 = vsel %vm899, %v883, -inf
        %v901 = vsel %vm899, %v884, -inf
        %v902 = vmax.f32 %v900, %v901
        %v903 = vrot.slane %v902, 4
        %v904 = vmax.f32 %v902, %v903
        %v905 = vrot.slane %v904, 2
        %v906 = vmax.f32 %v904, %v905
        %v907 = vrot.slane %v906, 1
        %v908 = vmax.f32 %v906, %v907
        %v909 = vsel %vm899, %v885, -inf
        %v910 = vsel %vm899, %v886, -inf
        %v911 = vmax.f32 %v909, %v910
        %v912 = vrot.slane %v911, 4
        %v913 = vmax.f32 %v911, %v912
        %v914 = vrot.slane %v913, 2
        %v915 = vmax.f32 %v913, %v914
        %v916 = vrot.slane %v915, 1
        %v917 = vmax.f32 %v915, %v916
        %v918 = vsel %vm899, %v887, -inf
        %v919 = vsel %vm899, %v888, -inf
        %v920 = vmax.f32 %v918, %v919
        %v921 = vrot.slane %v920, 4
        %v922 = vmax.f32 %v920, %v921
        %v923 = vrot.slane %v922, 2
        %v924 = vmax.f32 %v922, %v923
        %v925 = vrot.slane %v924, 1
        %v926 = vmax.f32 %v924, %v925
        %v927 = vsel %vm899, %v889, -inf
        %v928 = vsel %vm899, %v890, -inf
        %v929 = vmax.f32 %v927, %v928
        %v930 = vrot.slane %v929, 4
        %v931 = vmax.f32 %v929, %v930
        %v932 = vrot.slane %v931, 2
        %v933 = vmax.f32 %v931, %v932
        %v934 = vrot.slane %v933, 1
        %v935 = vmax.f32 %v933, %v934
        %v936 = vsel %vm899, %v891, -inf
        %v937 = vsel %vm899, %v892, -inf
        %v938 = vmax.f32 %v936, %v937
        %v939 = vrot.slane %v938, 4
        %v940 = vmax.f32 %v938, %v939
        %v941 = vrot.slane %v940, 2
        %v942 = vmax.f32 %v940, %v941
        %v943 = vrot.slane %v942, 1
        %v944 = vmax.f32 %v942, %v943
        %v945 = vsel %vm899, %v893, -inf
        %v946 = vsel %vm899, %v894, -inf
        %v947 = vmax.f32 %v945, %v946
        %v948 = vrot.slane %v947, 4
        %v949 = vmax.f32 %v947, %v948
        %v950 = vrot.slane %v949, 2
        %v951 = vmax.f32 %v949, %v950
        %v952 = vrot.slane %v951, 1
        %v953 = vmax.f32 %v951, %v952
        %v954 = vsel %vm899, %v895, -inf
        %v955 = vsel %vm899, %v896, -inf
        %v956 = vmax.f32 %v954, %v955
        %v957 = vrot.slane %v956, 4
        %v958 = vmax.f32 %v956, %v957
        %v959 = vrot.slane %v958, 2
        %v960 = vmax.f32 %v958, %v959
        %v961 = vrot.slane %v960, 1
        %v962 = vmax.f32 %v960, %v961
        %v963 = vsel %vm899, %v897, -inf
        %v964 = vsel %vm899, %v898, -inf
        %v965 = vmax.f32 %v963, %v964
        %v966 = vrot.slane %v965, 4
        %v967 = vmax.f32 %v965, %v966
        %v968 = vrot.slane %v967, 2
        %v969 = vmax.f32 %v967, %v968
        %v970 = vrot.slane %v969, 1
        %v971 = vmax.f32 %v969, %v970
        %v972 = vsub.f32 %v883, %v908
        %v973 = vsub.f32 %v884, %v908
        %v974 = vsub.f32 %v885, %v917
        %v975 = vsub.f32 %v886, %v917
        %v976 = vsub.f32 %v887, %v926
        %v977 = vsub.f32 %v888, %v926
        %v978 = vsub.f32 %v889, %v935
        %v979 = vsub.f32 %v890, %v935
        %v980 = vsub.f32 %v891, %v944
        %v981 = vsub.f32 %v892, %v944
        %v982 = vsub.f32 %v893, %v953
        %v983 = vsub.f32 %v894, %v953
        %v984 = vsub.f32 %v895, %v962
        %v985 = vsub.f32 %v896, %v962
        %v986 = vsub.f32 %v897, %v971
        %v987 = vsub.f32 %v898, %v971
        %v988 = vmul.f32 %v972, 1.442695
        %v989 = vpow.pop %v988
        %v990 = vmul.f32 %v973, 1.442695
        %v991 = vpow.pop %v990
        %v992 = vmul.f32 %v974, 1.442695
        %v993 = vpow.pop %v992
        %v994 = vmul.f32 %v975, 1.442695
        %v995 = vpow.pop %v994
        %v996 = vmul.f32 %v976, 1.442695
        %v997 = vpow.pop %v996
        %v998 = vmul.f32 %v977, 1.442695
        %v999 = vpow.pop %v998
        %v1000 = vmul.f32 %v978, 1.442695
        %v1001 = vpow.pop %v1000
        %v1002 = vmul.f32 %v979, 1.442695
        %v1003 = vpow.pop %v1002
        %v1004 = vmul.f32 %v980, 1.442695
        %v1005 = vpow.pop %v1004
        %v1006 = vmul.f32 %v981, 1.442695
        %v1007 = vpow.pop %v1006
        %v1008 = vmul.f32 %v982, 1.442695
        %v1009 = vpow.pop %v1008
        %v1010 = vmul.f32 %v983, 1.442695
        %v1011 = vpow.pop %v1010
        %v1012 = vmul.f32 %v984, 1.442695
        %v1013 = vpow.pop %v1012
        %v1014 = vmul.f32 %v985, 1.442695
        %v1015 = vpow.pop %v1014
        %v1016 = vmul.f32 %v986, 1.442695
        %v1017 = vpow.pop %v1016
        %v1018 = vmul.f32 %v987, 1.442695
        %v1019 = vpow.pop %v1018
        %v1020 = vsel %vm899, %v989, 0.0
        %v1021 = vsel %vm899, %v991, 0.0
        %v1022 = vadd.f32 %v1020, %v1021
        %v1023 = vrot.slane %v1022, 4
        %v1024 = vadd.f32 %v1022, %v1023
        %v1025 = vrot.slane %v1024, 2
        %v1026 = vadd.f32 %v1024, %v1025
        %v1027 = vrot.slane %v1026, 1
        %v1028 = vadd.f32 %v1026, %v1027
        %v1029 = vsel %vm899, %v993, 0.0
        %v1030 = vsel %vm899, %v995, 0.0
        %v1031 = vadd.f32 %v1029, %v1030
        %v1032 = vrot.slane %v1031, 4
        %v1033 = vadd.f32 %v1031, %v1032
        %v1034 = vrot.slane %v1033, 2
        %v1035 = vadd.f32 %v1033, %v1034
        %v1036 = vrot.slane %v1035, 1
        %v1037 = vadd.f32 %v1035, %v1036
        %v1038 = vsel %vm899, %v997, 0.0
        %v1039 = vsel %vm899, %v999, 0.0
        %v1040 = vadd.f32 %v1038, %v1039
        %v1041 = vrot.slane %v1040, 4
        %v1042 = vadd.f32 %v1040, %v1041
        %v1043 = vrot.slane %v1042, 2
        %v1044 = vadd.f32 %v1042, %v1043
        %v1045 = vrot.slane %v1044, 1
        %v1046 = vadd.f32 %v1044, %v1045
        %v1047 = vsel %vm899, %v1001, 0.0
        %v1048 = vsel %vm899, %v1003, 0.0
        %v1049 = vadd.f32 %v1047, %v1048
        %v1050 = vrot.slane %v1049, 4
        %v1051 = vadd.f32 %v1049, %v1050
        %v1052 = vrot.slane %v1051, 2
        %v1053 = vadd.f32 %v1051, %v1052
        %v1054 = vrot.slane %v1053, 1
        %v1055 = vadd.f32 %v1053, %v1054
        %v1056 = vsel %vm899, %v1005, 0.0
        %v1057 = vsel %vm899, %v1007, 0.0
        %v1058 = vadd.f32 %v1056, %v1057
        %v1059 = vrot.slane %v1058, 4
        %v1060 = vadd.f32 %v1058, %v1059
        %v1061 = vrot.slane %v1060, 2
        %v1062 = vadd.f32 %v1060, %v1061
        %v1063 = vrot.slane %v1062, 1
        %v1064 = vadd.f32 %v1062, %v1063
        %v1065 = vsel %vm899, %v1009, 0.0
        %v1066 = vsel %vm899, %v1011, 0.0
        %v1067 = vadd.f32 %v1065, %v1066
        %v1068 = vrot.slane %v1067, 4
        %v1069 = vadd.f32 %v1067, %v1068
        %v1070 = vrot.slane %v1069, 2
        %v1071 = vadd.f32 %v1069, %v1070
        %v1072 = vrot.slane %v1071, 1
        %v1073 = vadd.f32 %v1071, %v1072
        %v1074 = vsel %vm899, %v1013, 0.0
        %v1075 = vsel %vm899, %v1015, 0.0
        %v1076 = vadd.f32 %v1074, %v1075
        %v1077 = vrot.slane %v1076, 4
        %v1078 = vadd.f32 %v1076, %v1077
        %v1079 = vrot.slane %v1078, 2
        %v1080 = vadd.f32 %v1078, %v1079
        %v1081 = vrot.slane %v1080, 1
        %v1082 = vadd.f32 %v1080, %v1081
        %v1083 = vsel %vm899, %v1017, 0.0
        %v1084 = vsel %vm899, %v1019, 0.0
        %v1085 = vadd.f32 %v1083, %v1084
        %v1086 = vrot.slane %v1085, 4
        %v1087 = vadd.f32 %v1085, %v1086
        %v1088 = vrot.slane %v1087, 2
        %v1089 = vadd.f32 %v1087, %v1088
        %v1090 = vrot.slane %v1089, 1
        %v1091 = vadd.f32 %v1089, %v1090
        %v1092 = vrcp.pop %v1028
        %v1093 = vrcp.pop %v1037
        %v1094 = vrcp.pop %v1046
        %v1095 = vrcp.pop %v1055
        %v1096 = vrcp.pop %v1064
        %v1097 = vrcp.pop %v1073
        %v1098 = vrcp.pop %v1082
        %v1099 = vrcp.pop %v1091
        %v1100 = vmul.f32 %v989, %v1092
        %v1101 = vmul.f32 %v991, %v1092
        %v1102 = vmul.f32 %v993, %v1093
        %v1103 = vmul.f32 %v995, %v1093
        %v1104 = vmul.f32 %v997, %v1094
        %v1105 = vmul.f32 %v999, %v1094
        %v1106 = vmul.f32 %v1001, %v1095
        %v1107 = vmul.f32 %v1003, %v1095
        %v1108 = vmul.f32 %v1005, %v1096
        %v1109 = vmul.f32 %v1007, %v1096
        %v1110 = vmul.f32 %v1009, %v1097
        %v1111 = vmul.f32 %v1011, %v1097
        %v1112 = vmul.f32 %v1013, %v1098
        %v1113 = vmul.f32 %v1015, %v1098
        %v1114 = vmul.f32 %v1017, %v1099
        %v1115 = vmul.f32 %v1019, %v1099
        %v1116 = vunpack.c.l.bf16 %v366
        %v1117 = vunpack.c.l.bf16 %v367
        %v1118 = vunpack.c.l.bf16 %v368
        %v1119 = vunpack.c.l.bf16 %v369
        %v1120 = vunpack.c.l.bf16 %v370
        %v1121 = vunpack.c.l.bf16 %v371
        %v1122 = vunpack.c.l.bf16 %v372
        %v1123 = vunpack.c.l.bf16 %v373
        %v1124 = vunpack.c.l.bf16 %v374
        %v1125 = vunpack.c.l.bf16 %v375
        %v1126 = vunpack.c.l.bf16 %v376
        %v1127 = vunpack.c.l.bf16 %v377
        %v1128 = vunpack.c.l.bf16 %v378
        %v1129 = vunpack.c.l.bf16 %v379
        %v1130 = vunpack.c.l.bf16 %v380
        %v1131 = vunpack.c.l.bf16 %v381
        %1133 = vset.pattern.permute.xlu0 0
        %1134 = vperm.xlu0 %1133, %v1100
        %v1135 = vpop.permute.xlu0 %1134
        %1138 = vset.pattern.permute.xlu0 0
        %1139 = vperm.xlu0 %1138, %v1101
        %v1140 = vpop.permute.xlu0 %1139
        %1143 = vset.pattern.permute.xlu0 0
        %1144 = vperm.xlu0 %1143, %v1102
        %v1145 = vpop.permute.xlu0 %1144
        %1148 = vset.pattern.permute.xlu0 0
        %1149 = vperm.xlu0 %1148, %v1103
        %v1150 = vpop.permute.xlu0 %1149
        %1153 = vset.pattern.permute.xlu0 0
        %1154 = vperm.xlu0 %1153, %v1104
        %v1155 = vpop.permute.xlu0 %1154
        %1158 = vset.pattern.permute.xlu0 0
        %1159 = vperm.xlu0 %1158, %v1105
        %v1160 = vpop.permute.xlu0 %1159
        %1163 = vset.pattern.permute.xlu0 0
        %1164 = vperm.xlu0 %1163, %v1106
        %v1165 = vpop.permute.xlu0 %1164
        %1168 = vset.pattern.permute.xlu0 0
        %1169 = vperm.xlu0 %1168, %v1107
        %v1170 = vpop.permute.xlu0 %1169
        %1173 = vset.pattern.permute.xlu0 0
        %1174 = vperm.xlu0 %1173, %v1108
        %v1175 = vpop.permute.xlu0 %1174
        %1178 = vset.pattern.permute.xlu0 0
        %1179 = vperm.xlu0 %1178, %v1109
        %v1180 = vpop.permute.xlu0 %1179
        %1183 = vset.pattern.permute.xlu0 0
        %1184 = vperm.xlu0 %1183, %v1110
        %v1185 = vpop.permute.xlu0 %1184
        %1188 = vset.pattern.permute.xlu0 0
        %1189 = vperm.xlu0 %1188, %v1111
        %v1190 = vpop.permute.xlu0 %1189
        %1193 = vset.pattern.permute.xlu0 0
        %1194 = vperm.xlu0 %1193, %v1112
        %v1195 = vpop.permute.xlu0 %1194
        %1198 = vset.pattern.permute.xlu0 0
        %1199 = vperm.xlu0 %1198, %v1113
        %v1200 = vpop.permute.xlu0 %1199
        %1203 = vset.pattern.permute.xlu0 0
        %1204 = vperm.xlu0 %1203, %v1114
        %v1205 = vpop.permute.xlu0 %1204
        %1208 = vset.pattern.permute.xlu0 0
        %1209 = vperm.xlu0 %1208, %v1115
        %v1210 = vpop.permute.xlu0 %1209
        %v1212 = vmul.f32 %v1135, %v1116
        %v1213 = vmul.f32 %v1140, %v1117
        %v1214 = vmul.f32 %v1145, %v1118
        %v1215 = vmul.f32 %v1150, %v1119
        %v1216 = vmul.f32 %v1155, %v1120
        %v1217 = vmul.f32 %v1160, %v1121
        %v1218 = vmul.f32 %v1165, %v1122
        %v1219 = vmul.f32 %v1170, %v1123
        %v1220 = vmul.f32 %v1175, %v1124
        %v1221 = vmul.f32 %v1180, %v1125
        %v1222 = vmul.f32 %v1185, %v1126
        %v1223 = vmul.f32 %v1190, %v1127
        %v1224 = vmul.f32 %v1195, %v1128
        %v1225 = vmul.f32 %v1200, %v1129
        %v1226 = vmul.f32 %v1205, %v1130
        %v1227 = vmul.f32 %v1210, %v1131
        %v1228 = vadd.f32 %v1212, %v1213
        %v1229 = vrot.slane %v1228, 4
        %v1230 = vadd.f32 %v1228, %v1229
        %v1231 = vrot.slane %v1230, 2
        %v1232 = vadd.f32 %v1230, %v1231
        %v1233 = vrot.slane %v1232, 1
        %v1234 = vadd.f32 %v1232, %v1233
        %v1235 = vadd.f32 %v1214, %v1215
        %v1236 = vrot.slane %v1235, 4
        %v1237 = vadd.f32 %v1235, %v1236
        %v1238 = vrot.slane %v1237, 2
        %v1239 = vadd.f32 %v1237, %v1238
        %v1240 = vrot.slane %v1239, 1
        %v1241 = vadd.f32 %v1239, %v1240
        %v1242 = vadd.f32 %v1216, %v1217
        %v1243 = vrot.slane %v1242, 4
        %v1244 = vadd.f32 %v1242, %v1243
        %v1245 = vrot.slane %v1244, 2
        %v1246 = vadd.f32 %v1244, %v1245
        %v1247 = vrot.slane %v1246, 1
        %v1248 = vadd.f32 %v1246, %v1247
        %v1249 = vadd.f32 %v1218, %v1219
        %v1250 = vrot.slane %v1249, 4
        %v1251 = vadd.f32 %v1249, %v1250
        %v1252 = vrot.slane %v1251, 2
        %v1253 = vadd.f32 %v1251, %v1252
        %v1254 = vrot.slane %v1253, 1
        %v1255 = vadd.f32 %v1253, %v1254
        %v1256 = vadd.f32 %v1220, %v1221
        %v1257 = vrot.slane %v1256, 4
        %v1258 = vadd.f32 %v1256, %v1257
        %v1259 = vrot.slane %v1258, 2
        %v1260 = vadd.f32 %v1258, %v1259
        %v1261 = vrot.slane %v1260, 1
        %v1262 = vadd.f32 %v1260, %v1261
        %v1263 = vadd.f32 %v1222, %v1223
        %v1264 = vrot.slane %v1263, 4
        %v1265 = vadd.f32 %v1263, %v1264
        %v1266 = vrot.slane %v1265, 2
        %v1267 = vadd.f32 %v1265, %v1266
        %v1268 = vrot.slane %v1267, 1
        %v1269 = vadd.f32 %v1267, %v1268
        %v1270 = vadd.f32 %v1224, %v1225
        %v1271 = vrot.slane %v1270, 4
        %v1272 = vadd.f32 %v1270, %v1271
        %v1273 = vrot.slane %v1272, 2
        %v1274 = vadd.f32 %v1272, %v1273
        %v1275 = vrot.slane %v1274, 1
        %v1276 = vadd.f32 %v1274, %v1275
        %v1277 = vadd.f32 %v1226, %v1227
        %v1278 = vrot.slane %v1277, 4
        %v1279 = vadd.f32 %v1277, %v1278
        %v1280 = vrot.slane %v1279, 2
        %v1281 = vadd.f32 %v1279, %v1280
        %v1282 = vrot.slane %v1281, 1
        %v1283 = vadd.f32 %v1281, %v1282
        %v1285 = vrot.slane %v382, 1
        %v1286 = vrot.slane %v382, 2
        %v1287 = vrot.slane %v382, 3
        %v1288 = vrot.slane %v382, 4
        %v1289 = vrot.slane %v382, 5
        %v1290 = vrot.slane %v382, 6
        %v1291 = vrot.slane %v382, 7
        %v1300 = vadd.f32 %v1234, %v382
        %v1301 = vadd.f32 %v1241, %v1285
        %v1302 = vadd.f32 %v1248, %v1286
        %v1303 = vadd.f32 %v1255, %v1287
        %v1304 = vadd.f32 %v1262, %v1288
        %v1305 = vadd.f32 %v1269, %v1289
        %v1306 = vadd.f32 %v1276, %v1290
        %v1307 = vadd.f32 %v1283, %v1291
        %v1316 = vrot.slane %v1301, 7
        %vm1317 = vcmask 1041409
        %v1318 = vsel %vm1317, %v1316, %v1300
        %v1319 = vrot.slane %v1302, 6
        %vm1320 = vcmask 1042434
        %v1321 = vsel %vm1320, %v1319, %v1318
        %v1322 = vrot.slane %v1303, 5
        %vm1323 = vcmask 1043459
        %v1324 = vsel %vm1323, %v1322, %v1321
        %v1325 = vrot.slane %v1304, 4
        %vm1326 = vcmask 1044484
        %v1327 = vsel %vm1326, %v1325, %v1324
        %v1328 = vrot.slane %v1305, 3
        %vm1329 = vcmask 1045509
        %v1330 = vsel %vm1329, %v1328, %v1327
        %v1331 = vrot.slane %v1306, 2
        %vm1332 = vcmask 1046534
        %v1333 = vsel %vm1332, %v1331, %v1330
        %v1334 = vrot.slane %v1307, 1
        %vm1335 = vcmask 1047559
        %v1336 = vsel %vm1335, %v1334, %v1333
        %1338 = vst [vmem:[%s363] sm:$0xff] %v1336
        %s1339 = sand.u32 %s193, 1
        %s1340 = scalar_lea.sflag [#allocation4], %s1339
        %s1341 = sand.u32 %s193, 1
        %s1342 = smul.addr %s1341, 8
        %s1343 = scalar_lea.vmem [#allocation10], %s1342
        // Predicated region
        $region65: #{tpu_custom_call.1} parent=47 // pred_check
          %p1344 = pneg %p203
        $region66: #{tpu_custom_call.1} parent=47 // pred_check_branch
          %1346 = sbr.rel (%p1344) target = $region68
        $region67: #{tpu_custom_call.1} parent=47 // pred_region
          %s1348 = ssub.s32 128, 128
          %1349 = vsyncadd %s1340, %s1348
          %s1350 = smul.addr %s28, 128
          %s1351 = scalar_lea.hbm %s7, %s1350
          %s1353 = sshll.u32 %s1343, 4
          %s1354 = int_to_ptr.vmem [resolvable:$true] %s1353
          %1356 = dma.vmem_to_hbm [thread:$0]  %s1354, 128, %s1351, %s1340
        $region68: #{tpu_custom_call.1} parent=47 // pred_fallthru
          _
      $region48: #{tpu_custom_call.1} parent=5 // pred_fallthru
        _
      %p1357 = scmp.le.s32.totalorder 2, %s23
      // Predicated region
      $region69: #{tpu_custom_call.1} parent=5 // pred_check
        %p1358 = pneg %p1357
      $region70: #{tpu_custom_call.1} parent=5 // pred_check_branch
        %1360 = sbr.rel (%p1358) target = $region72
      $region71: #{tpu_custom_call.1} parent=5 // pred_region
        %s1361 = ssub.s32 %s23, 2
        // Predicated region
        $region73: #{tpu_custom_call.1} parent=71 // pred_check
          %p1362 = pneg %p209
        $region74: #{tpu_custom_call.1} parent=71 // pred_check_branch
          %1364 = sbr.rel (%p1362) target = $region76
        $region75: #{tpu_custom_call.1} parent=71 // pred_region
          %s1365 = sand.u32 %s194, 1
          %s1366 = scalar_lea.sflag [#allocation4], %s1365
          %s1367 = sand.u32 %s194, 1
          %s1368 = smul.addr %s1367, 8
          %s1369 = scalar_lea.vmem [#allocation10], %s1368
          %1370 = dma.done %s1366, 128
        $region76: #{tpu_custom_call.1} parent=71 // pred_fallthru
          _
      $region72: #{tpu_custom_call.1} parent=5 // pred_fallthru
        _
    $region6: #{tpu_custom_call.1} parent=1 // loop_footer
      %s27 = sadd.s32 1, %s23
    $region7: #{tpu_custom_call.1} parent=1 // loop_footer_branch
      %22 = sbr.rel target = $region3
    $region8: #{tpu_custom_call.1} parent=1 // loop_exit
      _
    %1371 = vsyncpa [#allocation3], 1
    %s1372 = scalar_lea.sflag [#allocation3], 1
    %1373 = vsyncpa %s1372, 1
    %1374 = vsyncpa [#allocation6], 1
    %s1375 = scalar_lea.sflag [#allocation6], 1
    %1376 = vsyncpa %s1375, 1
    %1377 = vsyncpa [#allocation9], 1
    %1378 = vsyncpa [#allocation4], 1
    %s1379 = scalar_lea.sflag [#allocation4], 1
    %1380 = vsyncpa %s1379, 1

</llo_original>
